<compile_context>
chip_gen: v5e
topology: v5e:2x2
jax: 0.10.0
libtpu: 0.0.40
codegen_flags: <defaults>
</compile_context>

<pallas_src>
import functools

import jax
import jax.numpy as jnp
from jax import lax
from jax.experimental import pallas as pl
from jax.experimental.pallas import tpu as pltpu


def _round_up(x, m):
    return ((x + m - 1) // m) * m


def _rnn_kernel(x_ref, wx_ref, wh_ref, b_ref, out_ref, state_ref, xproj_ref,
                *, block_t, nonlinearity):
    """One grid step == `block_t` timesteps of the RNN for one batch block.

    x_ref    : (block_t, bn, Hinp)   time-major input block
    wx_ref   : (Hinp, Hp)            pre-transposed W_i^T   (resident)
    wh_ref   : (Hp,   Hp)            pre-transposed W_h^T   (resident)
    b_ref    : (1, Hp) f32           fused bias (b_i + b_h) (resident)
    out_ref  : (block_t, bn, Hp)     time-major hidden states for these steps
    state_ref: (bn, Hp) f32          VMEM scratch carrying the recurrence
    xproj_ref: (block_t, bn, Hp) f32 VMEM scratch: hoisted input projection
    """
    t_blk = pl.program_id(1)

    @pl.when(t_blk == 0)
    def _():
        # state=None in PyTorch -> zero initial state (per batch block).
        state_ref[...] = jnp.zeros_like(state_ref)

    bt, bn, hin = x_ref.shape
    hp = xproj_ref.shape[-1]

    # ---- Hoisted input projection: one large-M GEMM for all block_t steps ----
    x_all = x_ref[...].reshape(bt * bn, hin)
    xp = jnp.dot(x_all, wx_ref[...], preferred_element_type=jnp.float32)
    xp = xp + b_ref[...]                      # bias folded in once per block
    xproj_ref[...] = xp.reshape(bt, bn, hp)

    if nonlinearity == "relu":
        nl = lambda z: jnp.maximum(z, 0.0)
    else:  # "tanh"
        nl = jnp.tanh

    # ---- Serial recurrence: only h @ W_h^T + xproj[i] per step ----
    def step(i, h):
        pre = jnp.dot(h.astype(wh_ref.dtype), wh_ref[...],
                      preferred_element_type=jnp.float32) + xproj_ref[i]
        h = nl(pre)
        out_ref[i] = h.astype(out_ref.dtype)   # full (bn, Hp) lane-dense store
        return h

    h = lax.fori_loop(0, block_t, step, state_ref[...], unroll=True)
    state_ref[...] = h


def rnn_forward(inputs, w_i, b_i, w_h, b_h, *, nonlinearity="tanh",
                block_t=32, block_n=128, matmul_dtype=None,
                out_dtype=jnp.float32):
    """inputs: (N, L, H_in).  Returns (outputs (N, L, H), hidden (N, H))."""
    N, L, H_in = inputs.shape
    H = w_i.shape[0]

    # Padded, lane-dense problem sizes.  bn: sublane dim of per-step tiles.
    bn = _round_up(min(max(N, 1), block_n), 8)
    Np = _round_up(N, bn)
    block_t = max(1, min(block_t, L))
    Lp = _round_up(L, block_t)
    Hinp = _round_up(H_in, 128)
    Hp = _round_up(H, 128)

    cdt = jnp.dtype(matmul_dtype) if matmul_dtype is not None else jnp.float32

    # Time-major, zero-padded input: (Lp, Np, Hinp).
    x_tm = jnp.transpose(inputs, (1, 0, 2)).astype(cdt)
    x_p = jnp.zeros((Lp, Np, Hinp), cdt).at[:L, :N, :H_in].set(x_tm)

    # Split, pre-transposed weights.  Zero padding keeps padded hidden lanes
    # exactly 0 (tanh(0) = relu(0) = 0), so padding never contaminates results.
    wx_p = jnp.zeros((Hinp, Hp), cdt).at[:H_in, :H].set(w_i.T.astype(cdt))
    wh_p = jnp.zeros((Hp, Hp), cdt).at[:H, :H].set(w_h.T.astype(cdt))
    b_p = jnp.zeros((1, Hp), jnp.float32).at[0, :H].set((b_i + b_h).astype(jnp.float32))

    grid = (Np // bn, Lp // block_t)
    kernel = functools.partial(_rnn_kernel, block_t=block_t,
                               nonlinearity=nonlinearity)

    # VMEM budget: double-buffered x/out blocks + resident weights + scratch,
    # with 2x headroom, clamped to [32 MiB, 64 MiB] (v7x has 64 MiB physical).
    isz_c = jnp.dtype(cdt).itemsize
    isz_o = jnp.dtype(out_dtype).itemsize
    need = (2 * bn * block_t * Hinp * isz_c
            + 2 * bn * block_t * Hp * isz_o
            + (Hinp * Hp + Hp * Hp) * isz_c + Hp * 4
            + bn * Hp * 4 + bn * block_t * Hp * 4)
    vmem_limit = int(min(max(2 * need, 32 * 1024 * 1024), 64 * 1024 * 1024))

    flops = 2 * Np * Lp * Hinp * Hp + 2 * Np * Lp * Hp * Hp
    transcendentals = Np * Lp * Hp if nonlinearity != "relu" else 0
    bytes_accessed = int(x_p.size * isz_c + (wx_p.size + wh_p.size) * isz_c
                         + b_p.size * 4 + Np * Lp * Hp * isz_o)

    def make_call(single_buffer_weights):
        w_kwargs = ({"pipeline_mode": pl.Buffered(1)}
                    if single_buffer_weights else {})
        return pl.pallas_call(
            kernel,
            out_shape=jax.ShapeDtypeStruct((Lp, Np, Hp), out_dtype),
            grid_spec=pltpu.PrefetchScalarGridSpec(
                num_scalar_prefetch=0,
                grid=grid,
                in_specs=[
                    pl.BlockSpec((block_t, bn, Hinp), lambda b, t: (t, b, 0)),
                    pl.BlockSpec((Hinp, Hp), lambda b, t: (0, 0), **w_kwargs),
                    pl.BlockSpec((Hp, Hp), lambda b, t: (0, 0), **w_kwargs),
                    pl.BlockSpec((1, Hp), lambda b, t: (0, 0), **w_kwargs),
                ],
                out_specs=pl.BlockSpec((block_t, bn, Hp), lambda b, t: (t, b, 0)),
                scratch_shapes=[
                    pltpu.VMEM((bn, Hp), jnp.float32),            # carried state
                    pltpu.VMEM((block_t, bn, Hp), jnp.float32),   # hoisted x-proj
                ],
            ),
            compiler_params=pltpu.CompilerParams(
                # batch blocks independent (megacore-parallel on v7x);
                # time blocks are a sequential recurrence -- must stay "arbitrary".
                dimension_semantics=("parallel", "arbitrary"),
                vmem_limit_bytes=vmem_limit,
            ),
            cost_estimate=pl.CostEstimate(
                flops=int(flops),
                transcendentals=int(transcendentals),
                bytes_accessed=bytes_accessed,
            ),
        )

    try:
        out_p = make_call(True)(x_p, wx_p, wh_p, b_p)
    except Exception:
        # pl.Buffered(1) unsupported on this jax build -> default buffering.
        out_p = make_call(False)(x_p, wx_p, wh_p, b_p)

    outputs = jnp.transpose(out_p[:L, :N, :H], (1, 0, 2)).astype(inputs.dtype)
    hidden = out_p[L - 1, :N, :H].astype(inputs.dtype)  # final state = last step
    return outputs, hidden


def init_params(key, input_size, hidden_size):
    """Match RNNBase._init_weights: uniform(-H^-0.5, H^-0.5) weights, zero bias."""
    bound = hidden_size ** (-0.5)
    k1, k2, k3 = jax.random.split(key, 3)
    w_i = jax.random.uniform(k1, (hidden_size, input_size), jnp.float32, -bound, bound)
    b_i = jnp.zeros((hidden_size,), jnp.float32)
    w_h = jax.random.uniform(k2, (hidden_size, hidden_size), jnp.float32, -bound, bound)
    b_h = jnp.zeros((hidden_size,), jnp.float32)
    # fc_o exists in the module but is unused in forward(); created for parity.
    w_o = jax.random.uniform(k3, (hidden_size, hidden_size), jnp.float32, -bound, bound)
    b_o = jnp.zeros((hidden_size,), jnp.float32)
    return dict(w_i=w_i, b_i=b_i, w_h=w_h, b_h=b_h, w_o=w_o, b_o=b_o)


def rnn_reference(inputs, w_i, b_i, w_h, b_h, nonlinearity="tanh"):
    """Pure-JAX reference matching the PyTorch forward loop."""
    N, L, _ = inputs.shape
    H = w_i.shape[0]
    nl = jnp.tanh if nonlinearity == "tanh" else (lambda z: jnp.maximum(z, 0.0))

    def step(state, x_t):
        state = nl(x_t @ w_i.T + b_i + state @ w_h.T + b_h)
        return state, state

    state0 = jnp.zeros((N, H), jnp.float32)
    h_final, outs = jax.lax.scan(step, state0, jnp.transpose(inputs, (1, 0, 2)))
    return jnp.transpose(outs, (1, 0, 2)), h_final


if __name__ == "__main__":
    key = jax.random.PRNGKey(0)
    kp, kx, kx2 = jax.random.split(key, 3)

    # --- small case matching the module's expected shapes -------------------
    N, L, H_in, H = 2, 8, 16, 32
    params = init_params(kp, H_in, H)
    x = jax.random.normal(kx, (N, L, H_in), jnp.float32)

    ref_out, ref_h = rnn_reference(
        x, params["w_i"], params["b_i"], params["w_h"], params["b_h"], "tanh")

    outputs, hidden = rnn_forward(
        x, params["w_i"], params["b_i"], params["w_h"], params["b_h"],
        nonlinearity="tanh")
    jax.block_until_ready((outputs, hidden))
    assert outputs.shape == (N, L, H) and hidden.shape == (N, H)
    assert jnp.allclose(outputs, ref_out, atol=1e-4, rtol=1e-4)
    assert jnp.allclose(hidden, ref_h, atol=1e-4, rtol=1e-4)

    # relu nonlinearity path
    out_r, hid_r = rnn_forward(
        x, params["w_i"], params["b_i"], params["w_h"], params["b_h"],
        nonlinearity="relu")
    jax.block_until_ready((out_r, hid_r))
    ref_out_r, ref_h_r = rnn_reference(
        x, params["w_i"], params["b_i"], params["w_h"], params["b_h"], "relu")
    assert jnp.allclose(out_r, ref_out_r, atol=1e-4, rtol=1e-4)
    assert jnp.allclose(hid_r, ref_h_r, atol=1e-4, rtol=1e-4)

    # --- multi-block grid (batch + timestep blocks, with padding) -----------
    N2, L2 = 10, 20
    x2 = jax.random.normal(kx2, (N2, L2, H_in), jnp.float32)
    out2, hid2 = rnn_forward(
        x2, params["w_i"], params["b_i"], params["w_h"], params["b_h"],
        nonlinearity="tanh", block_t=8, block_n=8)
    jax.block_until_ready((out2, hid2))
    ref_out2, ref_h2 = rnn_reference(
        x2, params["w_i"], params["b_i"], params["w_h"], params["b_h"], "tanh")
    assert out2.shape == (N2, L2, H) and hid2.shape == (N2, H)
    assert jnp.allclose(out2, ref_out2, atol=1e-4, rtol=1e-4)
    assert jnp.allclose(hid2, ref_h2, atol=1e-4, rtol=1e-4)

    # --- bf16 GEMM operands (f32 accumulate / f32 state), looser tolerance --
    out_bf, hid_bf = rnn_forward(
        x, params["w_i"], params["b_i"], params["w_h"], params["b_h"],
        nonlinearity="tanh", matmul_dtype=jnp.bfloat16)
    jax.block_until_ready((out_bf, hid_bf))
    assert jnp.allclose(out_bf, ref_out, atol=5e-2, rtol=5e-2)
    assert jnp.allclose(hid_bf, ref_h, atol=5e-2, rtol=5e-2)

    print("KERNEL_OK")
</pallas_src>

<mosaic_0001>
module attributes {stable_mosaic.version = 11 : i64} {
  func.func @_rnn_kernel(%arg0: i32, %arg1: i32, %arg2: memref<8x8x128xf32, #tpu.memory_space<vmem>>, %arg3: memref<128x128xf32, #tpu.memory_space<vmem>>, %arg4: memref<128x128xf32, #tpu.memory_space<vmem>>, %arg5: memref<1x128xf32, #tpu.memory_space<vmem>>, %arg6: memref<8x8x128xf32, #tpu.memory_space<vmem>>, %arg7: memref<8x128xf32, #tpu.memory_space<vmem>>, %arg8: memref<8x8x128xf32, #tpu.memory_space<vmem>>) attributes {dimension_semantics = [#tpu.dimension_semantics<parallel>, #tpu.dimension_semantics<arbitrary>], iteration_bounds = array<i64: 1, 1>, scalar_prefetch = 0 : i64, scratch_operands = 2 : i64, tpu.core_type = #tpu.core_type<tc>, window_params = [{transform_indices = @transform_0, window_bounds = array<i64: 8, 8, 128>}, {pipeline_mode = #tpu.pipeline_mode<synchronous>, transform_indices = @transform_1, window_bounds = array<i64: 128, 128>}, {pipeline_mode = #tpu.pipeline_mode<synchronous>, transform_indices = @transform_2, window_bounds = array<i64: 128, 128>}, {pipeline_mode = #tpu.pipeline_mode<synchronous>, transform_indices = @transform_3, window_bounds = array<i64: 1, 128>}, {transform_indices = @transform_4, window_bounds = array<i64: 8, 8, 128>}]} {
    %c0_i32 = arith.constant 0 : i32
    %0 = arith.cmpi eq, %arg1, %c0_i32 : i32
    %1 = arith.extui %0 : i1 to i32
    %c0_i32_0 = arith.constant 0 : i32
    %2 = arith.cmpi ne, %1, %c0_i32_0 : i32
    scf.if %2 {
      %cst_71 = arith.constant 0.000000e+00 : f32
      %102 = vector.broadcast %cst_71 : f32 to vector<8x128xf32>
      %c0_72 = arith.constant 0 : index
      %c0_73 = arith.constant 0 : index
      %103 = vector.load %arg7[%c0_72, %c0_73] : memref<8x128xf32, #tpu.memory_space<vmem>>, vector<8x128xf32>
      tpu.vector_store %arg7[%c0_72, %c0_73], %102 {strides = array<i32>} : memref<8x128xf32, #tpu.memory_space<vmem>>, vector<8x128xf32>,
    } else {
    }
    %c0 = arith.constant 0 : index
    %c0_1 = arith.constant 0 : index
    %c0_2 = arith.constant 0 : index
    %3 = vector.load %arg2[%c0, %c0_1, %c0_2] : memref<8x8x128xf32, #tpu.memory_space<vmem>>, vector<8x8x128xf32>
    %4 = vector.shape_cast %3 : vector<8x8x128xf32> to vector<64x128xf32>
    %c0_3 = arith.constant 0 : index
    %c0_4 = arith.constant 0 : index
    %5 = vector.load %arg3[%c0_3, %c0_4] : memref<128x128xf32, #tpu.memory_space<vmem>>, vector<128x128xf32>
    %cst = arith.constant dense<0.000000e+00> : vector<64x128xf32>
    %6 = tpu.matmul %4, %5, %cst {dimension_numbers = #tpu.dot_dimension_numbers<[1], [0], [0], [1], [0, 0, 1, 1], [], []>} : vector<64x128xf32>, vector<128x128xf32>, vector<64x128xf32> -> vector<64x128xf32>
    %c0_5 = arith.constant 0 : index
    %c0_6 = arith.constant 0 : index
    %7 = vector.load %arg5[%c0_5, %c0_6] : memref<1x128xf32, #tpu.memory_space<vmem>>, vector<1x128xf32>
    %8 = vector.broadcast %7 : vector<1x128xf32> to vector<64x128xf32>
    %9 = arith.addf %6, %8 : vector<64x128xf32>
    %10 = vector.shape_cast %9 : vector<64x128xf32> to vector<8x8x128xf32>
    %c0_7 = arith.constant 0 : index
    %c0_8 = arith.constant 0 : index
    %c0_9 = arith.constant 0 : index
    %11 = vector.load %arg8[%c0_7, %c0_8, %c0_9] : memref<8x8x128xf32, #tpu.memory_space<vmem>>, vector<8x8x128xf32>
    tpu.vector_store %arg8[%c0_7, %c0_8, %c0_9], %10 {strides = array<i32>} : memref<8x8x128xf32, #tpu.memory_space<vmem>>, vector<8x8x128xf32>,
    %c0_10 = arith.constant 0 : index
    %c0_11 = arith.constant 0 : index
    %12 = vector.load %arg7[%c0_10, %c0_11] : memref<8x128xf32, #tpu.memory_space<vmem>>, vector<8x128xf32>
    %c0_i32_12 = arith.constant 0 : i32
    %c0_13 = arith.constant 0 : index
    %c0_14 = arith.constant 0 : index
    %13 = vector.load %arg4[%c0_13, %c0_14] : memref<128x128xf32, #tpu.memory_space<vmem>>, vector<128x128xf32>
    %cst_15 = arith.constant dense<0.000000e+00> : vector<8x128xf32>
    %14 = tpu.matmul %12, %13, %cst_15 {dimension_numbers = #tpu.dot_dimension_numbers<[1], [0], [0], [1], [0, 0, 1, 1], [], []>} : vector<8x128xf32>, vector<128x128xf32>, vector<8x128xf32> -> vector<8x128xf32>
    %15 = arith.index_cast %c0_i32_12 : i32 to index
    %c0_16 = arith.constant 0 : index
    %c0_17 = arith.constant 0 : index
    %16 = vector.load %arg8[%15, %c0_16, %c0_17] : memref<8x8x128xf32, #tpu.memory_space<vmem>>, vector<1x8x128xf32>
    %17 = vector.shape_cast %16 : vector<1x8x128xf32> to vector<8x128xf32>
    %18 = arith.addf %14, %17 : vector<8x128xf32>
    %19 = math.tanh %18 : vector<8x128xf32>
    %20 = arith.index_cast %c0_i32_12 : i32 to index
    %c0_18 = arith.constant 0 : index
    %c0_19 = arith.constant 0 : index
    %21 = vector.load %arg6[%20, %c0_18, %c0_19] : memref<8x8x128xf32, #tpu.memory_space<vmem>>, vector<1x8x128xf32>
    %22 = vector.shape_cast %21 : vector<1x8x128xf32> to vector<8x128xf32>
    %23 = vector.shape_cast %19 : vector<8x128xf32> to vector<1x8x128xf32>
    tpu.vector_store %arg6[%20, %c0_18, %c0_19], %23 {strides = array<i32>} : memref<8x8x128xf32, #tpu.memory_space<vmem>>, vector<1x8x128xf32>,
    %c1_i32 = arith.constant 1 : i32
    %c0_20 = arith.constant 0 : index
    %c0_21 = arith.constant 0 : index
    %24 = vector.load %arg4[%c0_20, %c0_21] : memref<128x128xf32, #tpu.memory_space<vmem>>, vector<128x128xf32>
    %cst_22 = arith.constant dense<0.000000e+00> : vector<8x128xf32>
    %25 = tpu.matmul %19, %24, %cst_22 {dimension_numbers = #tpu.dot_dimension_numbers<[1], [0], [0], [1], [0, 0, 1, 1], [], []>} : vector<8x128xf32>, vector<128x128xf32>, vector<8x128xf32> -> vector<8x128xf32>
    %26 = arith.index_cast %c1_i32 : i32 to index
    %c0_23 = arith.constant 0 : index
    %c0_24 = arith.constant 0 : index
    %27 = vector.load %arg8[%26, %c0_23, %c0_24] : memref<8x8x128xf32, #tpu.memory_space<vmem>>, vector<1x8x128xf32>
    %28 = vector.shape_cast %27 : vector<1x8x128xf32> to vector<8x128xf32>
    %29 = arith.addf %25, %28 : vector<8x128xf32>
    %30 = math.tanh %29 : vector<8x128xf32>
    %31 = arith.index_cast %c1_i32 : i32 to index
    %c0_25 = arith.constant 0 : index
    %c0_26 = arith.constant 0 : index
    %32 = vector.load %arg6[%31, %c0_25, %c0_26] : memref<8x8x128xf32, #tpu.memory_space<vmem>>, vector<1x8x128xf32>
    %33 = vector.shape_cast %32 : vector<1x8x128xf32> to vector<8x128xf32>
    %34 = vector.shape_cast %30 : vector<8x128xf32> to vector<1x8x128xf32>
    tpu.vector_store %arg6[%31, %c0_25, %c0_26], %34 {strides = array<i32>} : memref<8x8x128xf32, #tpu.memory_space<vmem>>, vector<1x8x128xf32>,
    %c2_i32 = arith.constant 2 : i32
    %c0_27 = arith.constant 0 : index
    %c0_28 = arith.constant 0 : index
    %35 = vector.load %arg4[%c0_27, %c0_28] : memref<128x128xf32, #tpu.memory_space<vmem>>, vector<128x128xf32>
    %cst_29 = arith.constant dense<0.000000e+00> : vector<8x128xf32>
    %36 = tpu.matmul %30, %35, %cst_29 {dimension_numbers = #tpu.dot_dimension_numbers<[1], [0], [0], [1], [0, 0, 1, 1], [], []>} : vector<8x128xf32>, vector<128x128xf32>, vector<8x128xf32> -> vector<8x128xf32>
    %37 = arith.index_cast %c2_i32 : i32 to index
    %c0_30 = arith.constant 0 : index
    %c0_31 = arith.constant 0 : index
    %38 = vector.load %arg8[%37, %c0_30, %c0_31] : memref<8x8x128xf32, #tpu.memory_space<vmem>>, vector<1x8x128xf32>
    %39 = vector.shape_cast %38 : vector<1x8x128xf32> to vector<8x128xf32>
    %40 = arith.addf %36, %39 : vector<8x128xf32>
    %41 = math.tanh %40 : vector<8x128xf32>
    %42 = arith.index_cast %c2_i32 : i32 to index
    %c0_32 = arith.constant 0 : index
    %c0_33 = arith.constant 0 : index
    %43 = vector.load %arg6[%42, %c0_32, %c0_33] : memref<8x8x128xf32, #tpu.memory_space<vmem>>, vector<1x8x128xf32>
    %44 = vector.shape_cast %43 : vector<1x8x128xf32> to vector<8x128xf32>
    %45 = vector.shape_cast %41 : vector<8x128xf32> to vector<1x8x128xf32>
    tpu.vector_store %arg6[%42, %c0_32, %c0_33], %45 {strides = array<i32>} : memref<8x8x128xf32, #tpu.memory_space<vmem>>, vector<1x8x128xf32>,
    %c3_i32 = arith.constant 3 : i32
    %c0_34 = arith.constant 0 : index
    %c0_35 = arith.constant 0 : index
    %46 = vector.load %arg4[%c0_34, %c0_35] : memref<128x128xf32, #tpu.memory_space<vmem>>, vector<128x128xf32>
    %cst_36 = arith.constant dense<0.000000e+00> : vector<8x128xf32>
    %47 = tpu.matmul %41, %46, %cst_36 {dimension_numbers = #tpu.dot_dimension_numbers<[1], [0], [0], [1], [0, 0, 1, 1], [], []>} : vector<8x128xf32>, vector<128x128xf32>, vector<8x128xf32> -> vector<8x128xf32>
    %48 = arith.index_cast %c3_i32 : i32 to index
    %c0_37 = arith.constant 0 : index
    %c0_38 = arith.constant 0 : index
    %49 = vector.load %arg8[%48, %c0_37, %c0_38] : memref<8x8x128xf32, #tpu.memory_space<vmem>>, vector<1x8x128xf32>
    %50 = vector.shape_cast %49 : vector<1x8x128xf32> to vector<8x128xf32>
    %51 = arith.addf %47, %50 : vector<8x128xf32>
    %52 = math.tanh %51 : vector<8x128xf32>
    %53 = arith.index_cast %c3_i32 : i32 to index
    %c0_39 = arith.constant 0 : index
    %c0_40 = arith.constant 0 : index
    %54 = vector.load %arg6[%53, %c0_39, %c0_40] : memref<8x8x128xf32, #tpu.memory_space<vmem>>, vector<1x8x128xf32>
    %55 = vector.shape_cast %54 : vector<1x8x128xf32> to vector<8x128xf32>
    %56 = vector.shape_cast %52 : vector<8x128xf32> to vector<1x8x128xf32>
    tpu.vector_store %arg6[%53, %c0_39, %c0_40], %56 {strides = array<i32>} : memref<8x8x128xf32, #tpu.memory_space<vmem>>, vector<1x8x128xf32>,
    %c4_i32 = arith.constant 4 : i32
    %c0_41 = arith.constant 0 : index
    %c0_42 = arith.constant 0 : index
    %57 = vector.load %arg4[%c0_41, %c0_42] : memref<128x128xf32, #tpu.memory_space<vmem>>, vector<128x128xf32>
    %cst_43 = arith.constant dense<0.000000e+00> : vector<8x128xf32>
    %58 = tpu.matmul %52, %57, %cst_43 {dimension_numbers = #tpu.dot_dimension_numbers<[1], [0], [0], [1], [0, 0, 1, 1], [], []>} : vector<8x128xf32>, vector<128x128xf32>, vector<8x128xf32> -> vector<8x128xf32>
    %59 = arith.index_cast %c4_i32 : i32 to index
    %c0_44 = arith.constant 0 : index
    %c0_45 = arith.constant 0 : index
    %60 = vector.load %arg8[%59, %c0_44, %c0_45] : memref<8x8x128xf32, #tpu.memory_space<vmem>>, vector<1x8x128xf32>
    %61 = vector.shape_cast %60 : vector<1x8x128xf32> to vector<8x128xf32>
    %62 = arith.addf %58, %61 : vector<8x128xf32>
    %63 = math.tanh %62 : vector<8x128xf32>
    %64 = arith.index_cast %c4_i32 : i32 to index
    %c0_46 = arith.constant 0 : index
    %c0_47 = arith.constant 0 : index
    %65 = vector.load %arg6[%64, %c0_46, %c0_47] : memref<8x8x128xf32, #tpu.memory_space<vmem>>, vector<1x8x128xf32>
    %66 = vector.shape_cast %65 : vector<1x8x128xf32> to vector<8x128xf32>
    %67 = vector.shape_cast %63 : vector<8x128xf32> to vector<1x8x128xf32>
    tpu.vector_store %arg6[%64, %c0_46, %c0_47], %67 {strides = array<i32>} : memref<8x8x128xf32, #tpu.memory_space<vmem>>, vector<1x8x128xf32>,
    %c5_i32 = arith.constant 5 : i32
    %c0_48 = arith.constant 0 : index
    %c0_49 = arith.constant 0 : index
    %68 = vector.load %arg4[%c0_48, %c0_49] : memref<128x128xf32, #tpu.memory_space<vmem>>, vector<128x128xf32>
    %cst_50 = arith.constant dense<0.000000e+00> : vector<8x128xf32>
    %69 = tpu.matmul %63, %68, %cst_50 {dimension_numbers = #tpu.dot_dimension_numbers<[1], [0], [0], [1], [0, 0, 1, 1], [], []>} : vector<8x128xf32>, vector<128x128xf32>, vector<8x128xf32> -> vector<8x128xf32>
    %70 = arith.index_cast %c5_i32 : i32 to index
    %c0_51 = arith.constant 0 : index
    %c0_52 = arith.constant 0 : index
    %71 = vector.load %arg8[%70, %c0_51, %c0_52] : memref<8x8x128xf32, #tpu.memory_space<vmem>>, vector<1x8x128xf32>
    %72 = vector.shape_cast %71 : vector<1x8x128xf32> to vector<8x128xf32>
    %73 = arith.addf %69, %72 : vector<8x128xf32>
    %74 = math.tanh %73 : vector<8x128xf32>
    %75 = arith.index_cast %c5_i32 : i32 to index
    %c0_53 = arith.constant 0 : index
    %c0_54 = arith.constant 0 : index
    %76 = vector.load %arg6[%75, %c0_53, %c0_54] : memref<8x8x128xf32, #tpu.memory_space<vmem>>, vector<1x8x128xf32>
    %77 = vector.shape_cast %76 : vector<1x8x128xf32> to vector<8x128xf32>
    %78 = vector.shape_cast %74 : vector<8x128xf32> to vector<1x8x128xf32>
    tpu.vector_store %arg6[%75, %c0_53, %c0_54], %78 {strides = array<i32>} : memref<8x8x128xf32, #tpu.memory_space<vmem>>, vector<1x8x128xf32>,
    %c6_i32 = arith.constant 6 : i32
    %c0_55 = arith.constant 0 : index
    %c0_56 = arith.constant 0 : index
    %79 = vector.load %arg4[%c0_55, %c0_56] : memref<128x128xf32, #tpu.memory_space<vmem>>, vector<128x128xf32>
    %cst_57 = arith.constant dense<0.000000e+00> : vector<8x128xf32>
    %80 = tpu.matmul %74, %79, %cst_57 {dimension_numbers = #tpu.dot_dimension_numbers<[1], [0], [0], [1], [0, 0, 1, 1], [], []>} : vector<8x128xf32>, vector<128x128xf32>, vector<8x128xf32> -> vector<8x128xf32>
    %81 = arith.index_cast %c6_i32 : i32 to index
    %c0_58 = arith.constant 0 : index
    %c0_59 = arith.constant 0 : index
    %82 = vector.load %arg8[%81, %c0_58, %c0_59] : memref<8x8x128xf32, #tpu.memory_space<vmem>>, vector<1x8x128xf32>
    %83 = vector.shape_cast %82 : vector<1x8x128xf32> to vector<8x128xf32>
    %84 = arith.addf %80, %83 : vector<8x128xf32>
    %85 = math.tanh %84 : vector<8x128xf32>
    %86 = arith.index_cast %c6_i32 : i32 to index
    %c0_60 = arith.constant 0 : index
    %c0_61 = arith.constant 0 : index
    %87 = vector.load %arg6[%86, %c0_60, %c0_61] : memref<8x8x128xf32, #tpu.memory_space<vmem>>, vector<1x8x128xf32>
    %88 = vector.shape_cast %87 : vector<1x8x128xf32> to vector<8x128xf32>
    %89 = vector.shape_cast %85 : vector<8x128xf32> to vector<1x8x128xf32>
    tpu.vector_store %arg6[%86, %c0_60, %c0_61], %89 {strides = array<i32>} : memref<8x8x128xf32, #tpu.memory_space<vmem>>, vector<1x8x128xf32>,
    %c7_i32 = arith.constant 7 : i32
    %c0_62 = arith.constant 0 : index
    %c0_63 = arith.constant 0 : index
    %90 = vector.load %arg4[%c0_62, %c0_63] : memref<128x128xf32, #tpu.memory_space<vmem>>, vector<128x128xf32>
    %cst_64 = arith.constant dense<0.000000e+00> : vector<8x128xf32>
    %91 = tpu.matmul %85, %90, %cst_64 {dimension_numbers = #tpu.dot_dimension_numbers<[1], [0], [0], [1], [0, 0, 1, 1], [], []>} : vector<8x128xf32>, vector<128x128xf32>, vector<8x128xf32> -> vector<8x128xf32>
    %92 = arith.index_cast %c7_i32 : i32 to index
    %c0_65 = arith.constant 0 : index
    %c0_66 = arith.constant 0 : index
    %93 = vector.load %arg8[%92, %c0_65, %c0_66] : memref<8x8x128xf32, #tpu.memory_space<vmem>>, vector<1x8x128xf32>
    %94 = vector.shape_cast %93 : vector<1x8x128xf32> to vector<8x128xf32>
    %95 = arith.addf %91, %94 : vector<8x128xf32>
    %96 = math.tanh %95 : vector<8x128xf32>
    %97 = arith.index_cast %c7_i32 : i32 to index
    %c0_67 = arith.constant 0 : index
    %c0_68 = arith.constant 0 : index
    %98 = vector.load %arg6[%97, %c0_67, %c0_68] : memref<8x8x128xf32, #tpu.memory_space<vmem>>, vector<1x8x128xf32>
    %99 = vector.shape_cast %98 : vector<1x8x128xf32> to vector<8x128xf32>
    %100 = vector.shape_cast %96 : vector<8x128xf32> to vector<1x8x128xf32>
    tpu.vector_store %arg6[%97, %c0_67, %c0_68], %100 {strides = array<i32>} : memref<8x8x128xf32, #tpu.memory_space<vmem>>, vector<1x8x128xf32>,
    %c8_i32 = arith.constant 8 : i32
    %c0_69 = arith.constant 0 : index
    %c0_70 = arith.constant 0 : index
    %101 = vector.load %arg7[%c0_69, %c0_70] : memref<8x128xf32, #tpu.memory_space<vmem>>, vector<8x128xf32>
    tpu.vector_store %arg7[%c0_69, %c0_70], %96 {strides = array<i32>} : memref<8x128xf32, #tpu.memory_space<vmem>>, vector<8x128xf32>,
    return
  }
  func.func @transform_0(%arg0: i32, %arg1: i32) -> (i32, i32, i32) {
    %c0_i32 = arith.constant 0 : i32
    %c0_i32_0 = arith.constant 0 : i32
    return %arg1, %arg0, %c0_i32 : i32, i32, i32
  }
  func.func @transform_1(%arg0: i32, %arg1: i32) -> (i32, i32) {
    %c0_i32 = arith.constant 0 : i32
    %c0_i32_0 = arith.constant 0 : i32
    %c0_i32_1 = arith.constant 0 : i32
    return %c0_i32, %c0_i32_0 : i32, i32
  }
  func.func @transform_2(%arg0: i32, %arg1: i32) -> (i32, i32) {
    %c0_i32 = arith.constant 0 : i32
    %c0_i32_0 = arith.constant 0 : i32
    %c0_i32_1 = arith.constant 0 : i32
    return %c0_i32, %c0_i32_0 : i32, i32
  }
  func.func @transform_3(%arg0: i32, %arg1: i32) -> (i32, i32) {
    %c0_i32 = arith.constant 0 : i32
    %c0_i32_0 = arith.constant 0 : i32
    %c0_i32_1 = arith.constant 0 : i32
    return %c0_i32, %c0_i32_0 : i32, i32
  }
  func.func @transform_4(%arg0: i32, %arg1: i32) -> (i32, i32, i32) {
    %c0_i32 = arith.constant 0 : i32
    %c0_i32_0 = arith.constant 0 : i32
    return %arg1, %arg0, %c0_i32 : i32, i32, i32
  }
}

module attributes {stable_mosaic.version = 11 : i64} {
  func.func @_rnn_kernel(%arg0: i32, %arg1: i32, %arg2: memref<8x8x128xf32, #tpu.memory_space<vmem>>, %arg3: memref<128x128xf32, #tpu.memory_space<vmem>>, %arg4: memref<128x128xf32, #tpu.memory_space<vmem>>, %arg5: memref<1x128xf32, #tpu.memory_space<vmem>>, %arg6: memref<8x8x128xf32, #tpu.memory_space<vmem>>, %arg7: memref<8x128xf32, #tpu.memory_space<vmem>>, %arg8: memref<8x8x128xf32, #tpu.memory_space<vmem>>) attributes {dimension_semantics = [#tpu.dimension_semantics<parallel>, #tpu.dimension_semantics<arbitrary>], iteration_bounds = array<i64: 1, 1>, scalar_prefetch = 0 : i64, scratch_operands = 2 : i64, tpu.core_type = #tpu.core_type<tc>, window_params = [{transform_indices = @transform_0, window_bounds = array<i64: 8, 8, 128>}, {pipeline_mode = #tpu.pipeline_mode<synchronous>, transform_indices = @transform_1, window_bounds = array<i64: 128, 128>}, {pipeline_mode = #tpu.pipeline_mode<synchronous>, transform_indices = @transform_2, window_bounds = array<i64: 128, 128>}, {pipeline_mode = #tpu.pipeline_mode<synchronous>, transform_indices = @transform_3, window_bounds = array<i64: 1, 128>}, {transform_indices = @transform_4, window_bounds = array<i64: 8, 8, 128>}]} {
    %c0_i32 = arith.constant 0 : i32
    %0 = arith.cmpi eq, %arg1, %c0_i32 : i32
    %1 = arith.extui %0 : i1 to i32
    %c0_i32_0 = arith.constant 0 : i32
    %2 = arith.cmpi ne, %1, %c0_i32_0 : i32
    scf.if %2 {
      %cst_71 = arith.constant 0.000000e+00 : f32
      %102 = vector.broadcast %cst_71 : f32 to vector<8x128xf32>
      %c0_72 = arith.constant 0 : index
      %c0_73 = arith.constant 0 : index
      %103 = vector.load %arg7[%c0_72, %c0_73] : memref<8x128xf32, #tpu.memory_space<vmem>>, vector<8x128xf32>
      tpu.vector_store %arg7[%c0_72, %c0_73], %102 {strides = array<i32>} : memref<8x128xf32, #tpu.memory_space<vmem>>, vector<8x128xf32>,
    } else {
    }
    %c0 = arith.constant 0 : index
    %c0_1 = arith.constant 0 : index
    %c0_2 = arith.constant 0 : index
    %3 = vector.load %arg2[%c0, %c0_1, %c0_2] : memref<8x8x128xf32, #tpu.memory_space<vmem>>, vector<8x8x128xf32>
    %4 = vector.shape_cast %3 : vector<8x8x128xf32> to vector<64x128xf32>
    %c0_3 = arith.constant 0 : index
    %c0_4 = arith.constant 0 : index
    %5 = vector.load %arg3[%c0_3, %c0_4] : memref<128x128xf32, #tpu.memory_space<vmem>>, vector<128x128xf32>
    %cst = arith.constant dense<0.000000e+00> : vector<64x128xf32>
    %6 = tpu.matmul %4, %5, %cst {dimension_numbers = #tpu.dot_dimension_numbers<[1], [0], [0], [1], [0, 0, 1, 1], [], []>} : vector<64x128xf32>, vector<128x128xf32>, vector<64x128xf32> -> vector<64x128xf32>
    %c0_5 = arith.constant 0 : index
    %c0_6 = arith.constant 0 : index
    %7 = vector.load %arg5[%c0_5, %c0_6] : memref<1x128xf32, #tpu.memory_space<vmem>>, vector<1x128xf32>
    %8 = vector.broadcast %7 : vector<1x128xf32> to vector<64x128xf32>
    %9 = arith.addf %6, %8 : vector<64x128xf32>
    %10 = vector.shape_cast %9 : vector<64x128xf32> to vector<8x8x128xf32>
    %c0_7 = arith.constant 0 : index
    %c0_8 = arith.constant 0 : index
    %c0_9 = arith.constant 0 : index
    %11 = vector.load %arg8[%c0_7, %c0_8, %c0_9] : memref<8x8x128xf32, #tpu.memory_space<vmem>>, vector<8x8x128xf32>
    tpu.vector_store %arg8[%c0_7, %c0_8, %c0_9], %10 {strides = array<i32>} : memref<8x8x128xf32, #tpu.memory_space<vmem>>, vector<8x8x128xf32>,
    %c0_10 = arith.constant 0 : index
    %c0_11 = arith.constant 0 : index
    %12 = vector.load %arg7[%c0_10, %c0_11] : memref<8x128xf32, #tpu.memory_space<vmem>>, vector<8x128xf32>
    %c0_i32_12 = arith.constant 0 : i32
    %c0_13 = arith.constant 0 : index
    %c0_14 = arith.constant 0 : index
    %13 = vector.load %arg4[%c0_13, %c0_14] : memref<128x128xf32, #tpu.memory_space<vmem>>, vector<128x128xf32>
    %cst_15 = arith.constant dense<0.000000e+00> : vector<8x128xf32>
    %14 = tpu.matmul %12, %13, %cst_15 {dimension_numbers = #tpu.dot_dimension_numbers<[1], [0], [0], [1], [0, 0, 1, 1], [], []>} : vector<8x128xf32>, vector<128x128xf32>, vector<8x128xf32> -> vector<8x128xf32>
    %15 = arith.index_cast %c0_i32_12 : i32 to index
    %c0_16 = arith.constant 0 : index
    %c0_17 = arith.constant 0 : index
    %16 = vector.load %arg8[%15, %c0_16, %c0_17] : memref<8x8x128xf32, #tpu.memory_space<vmem>>, vector<1x8x128xf32>
    %17 = vector.shape_cast %16 : vector<1x8x128xf32> to vector<8x128xf32>
    %18 = arith.addf %14, %17 : vector<8x128xf32>
    %19 = math.tanh %18 : vector<8x128xf32>
    %20 = arith.index_cast %c0_i32_12 : i32 to index
    %c0_18 = arith.constant 0 : index
    %c0_19 = arith.constant 0 : index
    %21 = vector.load %arg6[%20, %c0_18, %c0_19] : memref<8x8x128xf32, #tpu.memory_space<vmem>>, vector<1x8x128xf32>
    %22 = vector.shape_cast %21 : vector<1x8x128xf32> to vector<8x128xf32>
    %23 = vector.shape_cast %19 : vector<8x128xf32> to vector<1x8x128xf32>
    tpu.vector_store %arg6[%20, %c0_18, %c0_19], %23 {strides = array<i32>} : memref<8x8x128xf32, #tpu.memory_space<vmem>>, vector<1x8x128xf32>,
    %c1_i32 = arith.constant 1 : i32
    %c0_20 = arith.constant 0 : index
    %c0_21 = arith.constant 0 : index
    %24 = vector.load %arg4[%c0_20, %c0_21] : memref<128x128xf32, #tpu.memory_space<vmem>>, vector<128x128xf32>
    %cst_22 = arith.constant dense<0.000000e+00> : vector<8x128xf32>
    %25 = tpu.matmul %19, %24, %cst_22 {dimension_numbers = #tpu.dot_dimension_numbers<[1], [0], [0], [1], [0, 0, 1, 1], [], []>} : vector<8x128xf32>, vector<128x128xf32>, vector<8x128xf32> -> vector<8x128xf32>
    %26 = arith.index_cast %c1_i32 : i32 to index
    %c0_23 = arith.constant 0 : index
    %c0_24 = arith.constant 0 : index
    %27 = vector.load %arg8[%26, %c0_23, %c0_24] : memref<8x8x128xf32, #tpu.memory_space<vmem>>, vector<1x8x128xf32>
    %28 = vector.shape_cast %27 : vector<1x8x128xf32> to vector<8x128xf32>
    %29 = arith.addf %25, %28 : vector<8x128xf32>
    %30 = math.tanh %29 : vector<8x128xf32>
    %31 = arith.index_cast %c1_i32 : i32 to index
    %c0_25 = arith.constant 0 : index
    %c0_26 = arith.constant 0 : index
    %32 = vector.load %arg6[%31, %c0_25, %c0_26] : memref<8x8x128xf32, #tpu.memory_space<vmem>>, vector<1x8x128xf32>
    %33 = vector.shape_cast %32 : vector<1x8x128xf32> to vector<8x128xf32>
    %34 = vector.shape_cast %30 : vector<8x128xf32> to vector<1x8x128xf32>
    tpu.vector_store %arg6[%31, %c0_25, %c0_26], %34 {strides = array<i32>} : memref<8x8x128xf32, #tpu.memory_space<vmem>>, vector<1x8x128xf32>,
    %c2_i32 = arith.constant 2 : i32
    %c0_27 = arith.constant 0 : index
    %c0_28 = arith.constant 0 : index
    %35 = vector.load %arg4[%c0_27, %c0_28] : memref<128x128xf32, #tpu.memory_space<vmem>>, vector<128x128xf32>
    %cst_29 = arith.constant dense<0.000000e+00> : vector<8x128xf32>
    %36 = tpu.matmul %30, %35, %cst_29 {dimension_numbers = #tpu.dot_dimension_numbers<[1], [0], [0], [1], [0, 0, 1, 1], [], []>} : vector<8x128xf32>, vector<128x128xf32>, vector<8x128xf32> -> vector<8x128xf32>
    %37 = arith.index_cast %c2_i32 : i32 to index
    %c0_30 = arith.constant 0 : index
    %c0_31 = arith.constant 0 : index
    %38 = vector.load %arg8[%37, %c0_30, %c0_31] : memref<8x8x128xf32, #tpu.memory_space<vmem>>, vector<1x8x128xf32>
    %39 = vector.shape_cast %38 : vector<1x8x128xf32> to vector<8x128xf32>
    %40 = arith.addf %36, %39 : vector<8x128xf32>
    %41 = math.tanh %40 : vector<8x128xf32>
    %42 = arith.index_cast %c2_i32 : i32 to index
    %c0_32 = arith.constant 0 : index
    %c0_33 = arith.constant 0 : index
    %43 = vector.load %arg6[%42, %c0_32, %c0_33] : memref<8x8x128xf32, #tpu.memory_space<vmem>>, vector<1x8x128xf32>
    %44 = vector.shape_cast %43 : vector<1x8x128xf32> to vector<8x128xf32>
    %45 = vector.shape_cast %41 : vector<8x128xf32> to vector<1x8x128xf32>
    tpu.vector_store %arg6[%42, %c0_32, %c0_33], %45 {strides = array<i32>} : memref<8x8x128xf32, #tpu.memory_space<vmem>>, vector<1x8x128xf32>,
    %c3_i32 = arith.constant 3 : i32
    %c0_34 = arith.constant 0 : index
    %c0_35 = arith.constant 0 : index
    %46 = vector.load %arg4[%c0_34, %c0_35] : memref<128x128xf32, #tpu.memory_space<vmem>>, vector<128x128xf32>
    %cst_36 = arith.constant dense<0.000000e+00> : vector<8x128xf32>
    %47 = tpu.matmul %41, %46, %cst_36 {dimension_numbers = #tpu.dot_dimension_numbers<[1], [0], [0], [1], [0, 0, 1, 1], [], []>} : vector<8x128xf32>, vector<128x128xf32>, vector<8x128xf32> -> vector<8x128xf32>
    %48 = arith.index_cast %c3_i32 : i32 to index
    %c0_37 = arith.constant 0 : index
    %c0_38 = arith.constant 0 : index
    %49 = vector.load %arg8[%48, %c0_37, %c0_38] : memref<8x8x128xf32, #tpu.memory_space<vmem>>, vector<1x8x128xf32>
    %50 = vector.shape_cast %49 : vector<1x8x128xf32> to vector<8x128xf32>
    %51 = arith.addf %47, %50 : vector<8x128xf32>
    %52 = math.tanh %51 : vector<8x128xf32>
    %53 = arith.index_cast %c3_i32 : i32 to index
    %c0_39 = arith.constant 0 : index
    %c0_40 = arith.constant 0 : index
    %54 = vector.load %arg6[%53, %c0_39, %c0_40] : memref<8x8x128xf32, #tpu.memory_space<vmem>>, vector<1x8x128xf32>
    %55 = vector.shape_cast %54 : vector<1x8x128xf32> to vector<8x128xf32>
    %56 = vector.shape_cast %52 : vector<8x128xf32> to vector<1x8x128xf32>
    tpu.vector_store %arg6[%53, %c0_39, %c0_40], %56 {strides = array<i32>} : memref<8x8x128xf32, #tpu.memory_space<vmem>>, vector<1x8x128xf32>,
    %c4_i32 = arith.constant 4 : i32
    %c0_41 = arith.constant 0 : index
    %c0_42 = arith.constant 0 : index
    %57 = vector.load %arg4[%c0_41, %c0_42] : memref<128x128xf32, #tpu.memory_space<vmem>>, vector<128x128xf32>
    %cst_43 = arith.constant dense<0.000000e+00> : vector<8x128xf32>
    %58 = tpu.matmul %52, %57, %cst_43 {dimension_numbers = #tpu.dot_dimension_numbers<[1], [0], [0], [1], [0, 0, 1, 1], [], []>} : vector<8x128xf32>, vector<128x128xf32>, vector<8x128xf32> -> vector<8x128xf32>
    %59 = arith.index_cast %c4_i32 : i32 to index
    %c0_44 = arith.constant 0 : index
    %c0_45 = arith.constant 0 : index
    %60 = vector.load %arg8[%59, %c0_44, %c0_45] : memref<8x8x128xf32, #tpu.memory_space<vmem>>, vector<1x8x128xf32>
    %61 = vector.shape_cast %60 : vector<1x8x128xf32> to vector<8x128xf32>
    %62 = arith.addf %58, %61 : vector<8x128xf32>
    %63 = math.tanh %62 : vector<8x128xf32>
    %64 = arith.index_cast %c4_i32 : i32 to index
    %c0_46 = arith.constant 0 : index
    %c0_47 = arith.constant 0 : index
    %65 = vector.load %arg6[%64, %c0_46, %c0_47] : memref<8x8x128xf32, #tpu.memory_space<vmem>>, vector<1x8x128xf32>
    %66 = vector.shape_cast %65 : vector<1x8x128xf32> to vector<8x128xf32>
    %67 = vector.shape_cast %63 : vector<8x128xf32> to vector<1x8x128xf32>
    tpu.vector_store %arg6[%64, %c0_46, %c0_47], %67 {strides = array<i32>} : memref<8x8x128xf32, #tpu.memory_space<vmem>>, vector<1x8x128xf32>,
    %c5_i32 = arith.constant 5 : i32
    %c0_48 = arith.constant 0 : index
    %c0_49 = arith.constant 0 : index
    %68 = vector.load %arg4[%c0_48, %c0_49] : memref<128x128xf32, #tpu.memory_space<vmem>>, vector<128x128xf32>
    %cst_50 = arith.constant dense<0.000000e+00> : vector<8x128xf32>
    %69 = tpu.matmul %63, %68, %cst_50 {dimension_numbers = #tpu.dot_dimension_numbers<[1], [0], [0], [1], [0, 0, 1, 1], [], []>} : vector<8x128xf32>, vector<128x128xf32>, vector<8x128xf32> -> vector<8x128xf32>
    %70 = arith.index_cast %c5_i32 : i32 to index
    %c0_51 = arith.constant 0 : index
    %c0_52 = arith.constant 0 : index
    %71 = vector.load %arg8[%70, %c0_51, %c0_52] : memref<8x8x128xf32, #tpu.memory_space<vmem>>, vector<1x8x128xf32>
    %72 = vector.shape_cast %71 : vector<1x8x128xf32> to vector<8x128xf32>
    %73 = arith.addf %69, %72 : vector<8x128xf32>
    %74 = math.tanh %73 : vector<8x128xf32>
    %75 = arith.index_cast %c5_i32 : i32 to index
    %c0_53 = arith.constant 0 : index
    %c0_54 = arith.constant 0 : index
    %76 = vector.load %arg6[%75, %c0_53, %c0_54] : memref<8x8x128xf32, #tpu.memory_space<vmem>>, vector<1x8x128xf32>
    %77 = vector.shape_cast %76 : vector<1x8x128xf32> to vector<8x128xf32>
    %78 = vector.shape_cast %74 : vector<8x128xf32> to vector<1x8x128xf32>
    tpu.vector_store %arg6[%75, %c0_53, %c0_54], %78 {strides = array<i32>} : memref<8x8x128xf32, #tpu.memory_space<vmem>>, vector<1x8x128xf32>,
    %c6_i32 = arith.constant 6 : i32
    %c0_55 = arith.constant 0 : index
    %c0_56 = arith.constant 0 : index
    %79 = vector.load %arg4[%c0_55, %c0_56] : memref<128x128xf32, #tpu.memory_space<vmem>>, vector<128x128xf32>
    %cst_57 = arith.constant dense<0.000000e+00> : vector<8x128xf32>
    %80 = tpu.matmul %74, %79, %cst_57 {dimension_numbers = #tpu.dot_dimension_numbers<[1], [0], [0], [1], [0, 0, 1, 1], [], []>} : vector<8x128xf32>, vector<128x128xf32>, vector<8x128xf32> -> vector<8x128xf32>
    %81 = arith.index_cast %c6_i32 : i32 to index
    %c0_58 = arith.constant 0 : index
    %c0_59 = arith.constant 0 : index
    %82 = vector.load %arg8[%81, %c0_58, %c0_59] : memref<8x8x128xf32, #tpu.memory_space<vmem>>, vector<1x8x128xf32>
    %83 = vector.shape_cast %82 : vector<1x8x128xf32> to vector<8x128xf32>
    %84 = arith.addf %80, %83 : vector<8x128xf32>
    %85 = math.tanh %84 : vector<8x128xf32>
    %86 = arith.index_cast %c6_i32 : i32 to index
    %c0_60 = arith.constant 0 : index
    %c0_61 = arith.constant 0 : index
    %87 = vector.load %arg6[%86, %c0_60, %c0_61] : memref<8x8x128xf32, #tpu.memory_space<vmem>>, vector<1x8x128xf32>
    %88 = vector.shape_cast %87 : vector<1x8x128xf32> to vector<8x128xf32>
    %89 = vector.shape_cast %85 : vector<8x128xf32> to vector<1x8x128xf32>
    tpu.vector_store %arg6[%86, %c0_60, %c0_61], %89 {strides = array<i32>} : memref<8x8x128xf32, #tpu.memory_space<vmem>>, vector<1x8x128xf32>,
    %c7_i32 = arith.constant 7 : i32
    %c0_62 = arith.constant 0 : index
    %c0_63 = arith.constant 0 : index
    %90 = vector.load %arg4[%c0_62, %c0_63] : memref<128x128xf32, #tpu.memory_space<vmem>>, vector<128x128xf32>
    %cst_64 = arith.constant dense<0.000000e+00> : vector<8x128xf32>
    %91 = tpu.matmul %85, %90, %cst_64 {dimension_numbers = #tpu.dot_dimension_numbers<[1], [0], [0], [1], [0, 0, 1, 1], [], []>} : vector<8x128xf32>, vector<128x128xf32>, vector<8x128xf32> -> vector<8x128xf32>
    %92 = arith.index_cast %c7_i32 : i32 to index
    %c0_65 = arith.constant 0 : index
    %c0_66 = arith.constant 0 : index
    %93 = vector.load %arg8[%92, %c0_65, %c0_66] : memref<8x8x128xf32, #tpu.memory_space<vmem>>, vector<1x8x128xf32>
    %94 = vector.shape_cast %93 : vector<1x8x128xf32> to vector<8x128xf32>
    %95 = arith.addf %91, %94 : vector<8x128xf32>
    %96 = math.tanh %95 : vector<8x128xf32>
    %97 = arith.index_cast %c7_i32 : i32 to index
    %c0_67 = arith.constant 0 : index
    %c0_68 = arith.constant 0 : index
    %98 = vector.load %arg6[%97, %c0_67, %c0_68] : memref<8x8x128xf32, #tpu.memory_space<vmem>>, vector<1x8x128xf32>
    %99 = vector.shape_cast %98 : vector<1x8x128xf32> to vector<8x128xf32>
    %100 = vector.shape_cast %96 : vector<8x128xf32> to vector<1x8x128xf32>
    tpu.vector_store %arg6[%97, %c0_67, %c0_68], %100 {strides = array<i32>} : memref<8x8x128xf32, #tpu.memory_space<vmem>>, vector<1x8x128xf32>,
    %c8_i32 = arith.constant 8 : i32
    %c0_69 = arith.constant 0 : index
    %c0_70 = arith.constant 0 : index
    %101 = vector.load %arg7[%c0_69, %c0_70] : memref<8x128xf32, #tpu.memory_space<vmem>>, vector<8x128xf32>
    tpu.vector_store %arg7[%c0_69, %c0_70], %96 {strides = array<i32>} : memref<8x128xf32, #tpu.memory_space<vmem>>, vector<8x128xf32>,
    return
  }
  func.func @transform_0(%arg0: i32, %arg1: i32) -> (i32, i32, i32) {
    %c0_i32 = arith.constant 0 : i32
    %c0_i32_0 = arith.constant 0 : i32
    return %arg1, %arg0, %c0_i32 : i32, i32, i32
  }
  func.func @transform_1(%arg0: i32, %arg1: i32) -> (i32, i32) {
    %c0_i32 = arith.constant 0 : i32
    %c0_i32_0 = arith.constant 0 : i32
    %c0_i32_1 = arith.constant 0 : i32
    return %c0_i32, %c0_i32_0 : i32, i32
  }
  func.func @transform_2(%arg0: i32, %arg1: i32) -> (i32, i32) {
    %c0_i32 = arith.constant 0 : i32
    %c0_i32_0 = arith.constant 0 : i32
    %c0_i32_1 = arith.constant 0 : i32
    return %c0_i32, %c0_i32_0 : i32, i32
  }
  func.func @transform_3(%arg0: i32, %arg1: i32) -> (i32, i32) {
    %c0_i32 = arith.constant 0 : i32
    %c0_i32_0 = arith.constant 0 : i32
    %c0_i32_1 = arith.constant 0 : i32
    return %c0_i32, %c0_i32_0 : i32, i32
  }
  func.func @transform_4(%arg0: i32, %arg1: i32) -> (i32, i32, i32) {
    %c0_i32 = arith.constant 0 : i32
    %c0_i32_0 = arith.constant 0 : i32
    return %arg1, %arg0, %c0_i32 : i32, i32, i32
  }
}

</mosaic_0001>

<llo_original>
// kernel: tpu_custom_call.1
$region0: #{tpu_custom_call.1}
  #allocation0 [shape = 'u32[]', space=smem, size = 0x4, offset = 0x4, fixed_abs, tag = 'smem constant byte address 0x4 - core index']
  #allocation1 [shape = 'u32[72,128]{1,0:T(1,128)}', space=vmem, size = 0x9000, scoped, tag = 'internal scratch']
  #allocation2 [shape = 'f32[8,128]{1,0:T(8,128)}', space=vmem, size = 0x1000, scoped, tag = 'scratch operand']
  #allocation3 [shape = 'f32[8,8,128]{2,1,0:T(8,128)}', space=vmem, size = 0x8000, scoped, tag = 'scratch operand']
  %s0 = inlined_call_operand.hbm [shape: f32[8,8,128], index: 0, kind: input, shape index: {}]
  %s1 = inlined_call_operand.hbm [shape: f32[128,128], index: 1, kind: input, shape index: {}]
  %s2 = inlined_call_operand.hbm [shape: f32[128,128], index: 2, kind: input, shape index: {}]
  %s3 = inlined_call_operand.vmem [shape: f32[1,128], index: 3, kind: input, shape index: {}]
  %s4 = inlined_call_operand.hbm [shape: f32[8,8,128], index: 4, kind: output, shape index: {}]
  %s5 = sld [smem:[#allocation0]]
  $region42: #{tpu_custom_call.1} parent=0
    _
  %s7 = ssub.s32 1, %s5
  %s8 = scalar_select 0, %s7, %s5
  $region1: #{tpu_custom_call.1} parent=0
    #allocation4 [shape = 'u8[32768]{0}', space=vmem, size = 0x8000, scoped, tag = 'input window, operand 0, single buffered']
    #allocation5 [shape = 's32[1]{0}', space=sflag, size = 0x4, scoped, tag = 'scoped memory for tpu_custom_call.1']
    #allocation6 [shape = 's32[1]{0}', space=sflag, size = 0x4, scoped, tag = 'scoped memory for tpu_custom_call.1']
    #allocation7 [shape = 'u8[65536]{0}', space=vmem, size = 0x10000, scoped, tag = 'input window, operand 1, single buffered']
    #allocation8 [shape = 's32[1]{0}', space=sflag, size = 0x4, scoped, tag = 'scoped memory for tpu_custom_call.1']
    #allocation9 [shape = 'u8[65536]{0}', space=vmem, size = 0x10000, scoped, tag = 'input window, operand 2, single buffered']
    #allocation10 [shape = 'u8[32768]{0}', space=vmem, size = 0x8000, scoped, tag = 'output window, operand 0, single buffered']
    %9 = vsyncpa [#allocation5], 0
    %10 = vsyncpa [#allocation8], 0
    %11 = vsyncpa [#allocation6], 0
    // Predicated region
    $region2: #{tpu_custom_call.1} parent=1 // pred_check
      _
    $region3: #{tpu_custom_call.1} parent=1 // pred_check_branch
      %13 = sbr.rel (0) target = $region5
    $region4: #{tpu_custom_call.1} parent=1 // pred_region
      %15 = vsyncadd [#allocation5], 0
      %s16 = sshll.u32 %s0, 4
      %s17 = int_to_ptr.hbm [resolvable:$true] %s16
      %s18 = sshll.u32 [#allocation4], 4
      %s19 = int_to_ptr.vmem [resolvable:$true] %s18
      %24 = dma.hbm_to_vmem [thread:$0]  %s17, 1024, %s19, [#allocation5], 128, 128, 8
    $region5: #{tpu_custom_call.1} parent=1 // pred_fallthru
      _
    // Predicated region
    $region6: #{tpu_custom_call.1} parent=1 // pred_check
      _
    $region7: #{tpu_custom_call.1} parent=1 // pred_check_branch
      %26 = sbr.rel (0) target = $region9
    $region8: #{tpu_custom_call.1} parent=1 // pred_region
      %28 = vsyncadd [#allocation8], 0
      %s29 = sshll.u32 %s1, 4
      %s30 = int_to_ptr.hbm [resolvable:$true] %s29
      %s31 = sshll.u32 [#allocation7], 4
      %s32 = int_to_ptr.vmem [resolvable:$true] %s31
      %37 = dma.hbm_to_vmem [thread:$0]  %s30, 2048, %s32, [#allocation8], 128, 128, 8
    $region9: #{tpu_custom_call.1} parent=1 // pred_fallthru
      _
    // Predicated region
    $region10: #{tpu_custom_call.1} parent=1 // pred_check
      _
    $region11: #{tpu_custom_call.1} parent=1 // pred_check_branch
      %39 = sbr.rel (0) target = $region13
    $region12: #{tpu_custom_call.1} parent=1 // pred_region
      %41 = vsyncadd [#allocation8], 0
      %s42 = sshll.u32 %s2, 4
      %s43 = int_to_ptr.hbm [resolvable:$true] %s42
      %s44 = sshll.u32 [#allocation9], 4
      %s45 = int_to_ptr.vmem [resolvable:$true] %s44
      %50 = dma.hbm_to_vmem [thread:$0]  %s43, 2048, %s45, [#allocation8], 128, 128, 8
    $region13: #{tpu_custom_call.1} parent=1 // pred_fallthru
      _
    // Predicated region
    $region14: #{tpu_custom_call.1} parent=1 // pred_check
      _
    $region15: #{tpu_custom_call.1} parent=1 // pred_check_branch
      %52 = sbr.rel (0) target = $region17
    $region16: #{tpu_custom_call.1} parent=1 // pred_region
      _
    $region17: #{tpu_custom_call.1} parent=1 // pred_fallthru
      _
    // Predicated region
    $region18: #{tpu_custom_call.1} parent=1 // pred_check
      _
    $region19: #{tpu_custom_call.1} parent=1 // pred_check_branch
      %54 = sbr.rel (0) target = $region21
    $region20: #{tpu_custom_call.1} parent=1 // pred_region
      %56 = dma.done [#allocation5], 1024
    $region21: #{tpu_custom_call.1} parent=1 // pred_fallthru
      _
    // Predicated region
    $region22: #{tpu_custom_call.1} parent=1 // pred_check
      _
    $region23: #{tpu_custom_call.1} parent=1 // pred_check_branch
      %58 = sbr.rel (0) target = $region25
    $region24: #{tpu_custom_call.1} parent=1 // pred_region
      %60 = dma.done [#allocation8], 2048
    $region25: #{tpu_custom_call.1} parent=1 // pred_fallthru
      _
    // Predicated region
    $region26: #{tpu_custom_call.1} parent=1 // pred_check
      _
    $region27: #{tpu_custom_call.1} parent=1 // pred_check_branch
      %62 = sbr.rel (0) target = $region29
    $region28: #{tpu_custom_call.1} parent=1 // pred_region
      %64 = dma.done [#allocation8], 2048
    $region29: #{tpu_custom_call.1} parent=1 // pred_fallthru
      _
    %p65 = scmp.eq.s32.totalorder 0, 0
    // Predicated region
    $region30: #{tpu_custom_call.1} parent=1 // pred_check
      %p66 = pneg %p65
    $region31: #{tpu_custom_call.1} parent=1 // pred_check_branch
      %68 = sbr.rel (%p66) target = $region33
    $region32: #{tpu_custom_call.1} parent=1 // pred_region
      %69 = vst [vmem:[#allocation2] sm:$0xff] 0.0
    $region33: #{tpu_custom_call.1} parent=1 // pred_fallthru
      _
    %v70 = vld [vmem:[#allocation4] sm:$0xff]
    %v71 = vld [vmem:[#allocation4 + $0x8] sm:$0xff]
    %v72 = vld [vmem:[#allocation4 + $0x10] sm:$0xff]
    %v73 = vld [vmem:[#allocation4 + $0x18] sm:$0xff]
    %v74 = vld [vmem:[#allocation4 + $0x20] sm:$0xff]
    %v75 = vld [vmem:[#allocation4 + $0x28] sm:$0xff]
    %v76 = vld [vmem:[#allocation4 + $0x30] sm:$0xff]
    %v77 = vld [vmem:[#allocation4 + $0x38] sm:$0xff]
    %v78 = vld [vmem:[#allocation7] sm:$0xff]
    %v79 = vld [vmem:[#allocation7 + $0x8] sm:$0xff]
    %v80 = vld [vmem:[#allocation7 + $0x10] sm:$0xff]
    %v81 = vld [vmem:[#allocation7 + $0x18] sm:$0xff]
    %v82 = vld [vmem:[#allocation7 + $0x20] sm:$0xff]
    %v83 = vld [vmem:[#allocation7 + $0x28] sm:$0xff]
    %v84 = vld [vmem:[#allocation7 + $0x30] sm:$0xff]
    %v85 = vld [vmem:[#allocation7 + $0x38] sm:$0xff]
    %v86 = vld [vmem:[#allocation7 + $0x40] sm:$0xff]
    %v87 = vld [vmem:[#allocation7 + $0x48] sm:$0xff]
    %v88 = vld [vmem:[#allocation7 + $0x50] sm:$0xff]
    %v89 = vld [vmem:[#allocation7 + $0x58] sm:$0xff]
    %v90 = vld [vmem:[#allocation7 + $0x60] sm:$0xff]
    %v91 = vld [vmem:[#allocation7 + $0x68] sm:$0xff]
    %v92 = vld [vmem:[#allocation7 + $0x70] sm:$0xff]
    %v93 = vld [vmem:[#allocation7 + $0x78] sm:$0xff]
    %v94 = vld [vmem:[%s3] sm:$0x1]
    %v96 = vperm.slane %v94, 0
    %98 = vmatpush.msra.mxu0 %v93
    %99 = vmatpush.msra.mxu0 %v92
    %100 = vmatpush.msra.mxu0 %v91
    %101 = vmatpush.msra.mxu0 %v90
    %102 = vmatpush.msra.mxu0 %v89
    %103 = vmatpush.msra.mxu0 %v88
    %104 = vmatpush.msra.mxu0 %v87
    %105 = vmatpush.msra.mxu0 %v86
    %106 = vmatpush.msra.mxu0 %v85
    %107 = vmatpush.msra.mxu0 %v84
    %108 = vmatpush.msra.mxu0 %v83
    %109 = vmatpush.msra.mxu0 %v82
    %110 = vmatpush.msra.mxu0 %v81
    %111 = vmatpush.msra.mxu0 %v80
    %112 = vmatpush.msra.mxu0 %v79
    %113 = vmatpush.msra.mxu0 %v78
    %114 = vmatmul.f32.gmra.mxu0 %v70
    %v115 = vpop.f32.mrf.mxu0
    %v116 = vadd.f32 %v96, %v115
    %117 = vmatmul.f32.gmra.mxu0 %v71
    %v118 = vpop.f32.mrf.mxu0
    %v119 = vadd.f32 %v96, %v118
    %120 = vmatmul.f32.gmra.mxu0 %v72
    %v121 = vpop.f32.mrf.mxu0
    %v122 = vadd.f32 %v96, %v121
    %123 = vmatmul.f32.gmra.mxu0 %v73
    %v124 = vpop.f32.mrf.mxu0
    %v125 = vadd.f32 %v96, %v124
    %126 = vmatmul.f32.gmra.mxu0 %v74
    %v127 = vpop.f32.mrf.mxu0
    %v128 = vadd.f32 %v96, %v127
    %129 = vmatmul.f32.gmra.mxu0 %v75
    %v130 = vpop.f32.mrf.mxu0
    %v131 = vadd.f32 %v96, %v130
    %132 = vmatmul.f32.gmra.mxu0 %v76
    %v133 = vpop.f32.mrf.mxu0
    %v134 = vadd.f32 %v96, %v133
    %135 = vmatmul.f32.gmra.mxu0 %v77
    %v136 = vpop.f32.mrf.mxu0
    %v137 = vadd.f32 %v96, %v136
    %138 = vdwg.mxu0
    %139 = vst [vmem:[#allocation3] sm:$0xff] %v116
    %140 = vst [vmem:[#allocation3 + $0x8] sm:$0xff] %v119
    %141 = vst [vmem:[#allocation3 + $0x10] sm:$0xff] %v122
    %142 = vst [vmem:[#allocation3 + $0x18] sm:$0xff] %v125
    %143 = vst [vmem:[#allocation3 + $0x20] sm:$0xff] %v128
    %144 = vst [vmem:[#allocation3 + $0x28] sm:$0xff] %v131
    %145 = vst [vmem:[#allocation3 + $0x30] sm:$0xff] %v134
    %146 = vst [vmem:[#allocation3 + $0x38] sm:$0xff] %v137
    %v147 = vld [vmem:[#allocation2] sm:$0xff]
    %v148 = vld [vmem:[#allocation9] sm:$0xff]
    %v149 = vld [vmem:[#allocation9 + $0x8] sm:$0xff]
    %v150 = vld [vmem:[#allocation9 + $0x10] sm:$0xff]
    %v151 = vld [vmem:[#allocation9 + $0x18] sm:$0xff]
    %v152 = vld [vmem:[#allocation9 + $0x20] sm:$0xff]
    %v153 = vld [vmem:[#allocation9 + $0x28] sm:$0xff]
    %v154 = vld [vmem:[#allocation9 + $0x30] sm:$0xff]
    %v155 = vld [vmem:[#allocation9 + $0x38] sm:$0xff]
    %v156 = vld [vmem:[#allocation9 + $0x40] sm:$0xff]
    %v157 = vld [vmem:[#allocation9 + $0x48] sm:$0xff]
    %v158 = vld [vmem:[#allocation9 + $0x50] sm:$0xff]
    %v159 = vld [vmem:[#allocation9 + $0x58] sm:$0xff]
    %v160 = vld [vmem:[#allocation9 + $0x60] sm:$0xff]
    %v161 = vld [vmem:[#allocation9 + $0x68] sm:$0xff]
    %v162 = vld [vmem:[#allocation9 + $0x70] sm:$0xff]
    %v163 = vld [vmem:[#allocation9 + $0x78] sm:$0xff]
    %v164 = vld [vmem:[#allocation3] sm:$0xff]
    %165 = vmatpush.msra.mxu0 %v163
    %166 = vmatpush.msra.mxu0 %v162
    %167 = vmatpush.msra.mxu0 %v161
    %168 = vmatpush.msra.mxu0 %v160
    %169 = vmatpush.msra.mxu0 %v159
    %170 = vmatpush.msra.mxu0 %v158
    %171 = vmatpush.msra.mxu0 %v157
    %172 = vmatpush.msra.mxu0 %v156
    %173 = vmatpush.msra.mxu0 %v155
    %174 = vmatpush.msra.mxu0 %v154
    %175 = vmatpush.msra.mxu0 %v153
    %176 = vmatpush.msra.mxu0 %v152
    %177 = vmatpush.msra.mxu0 %v151
    %178 = vmatpush.msra.mxu0 %v150
    %179 = vmatpush.msra.mxu0 %v149
    %180 = vmatpush.msra.mxu0 %v148
    %181 = vmatmul.f32.gmra.mxu0 %v147
    %v182 = vpop.f32.mrf.mxu0
    %v183 = vadd.f32 %v164, %v182
    %184 = vdwg.mxu0
    %v185 = vtanh.pop %v183
    %186 = vst [vmem:[#allocation10] sm:$0xff] %v185
    %v187 = vld [vmem:[#allocation9] sm:$0xff]
    %v188 = vld [vmem:[#allocation9 + $0x8] sm:$0xff]
    %v189 = vld [vmem:[#allocation9 + $0x10] sm:$0xff]
    %v190 = vld [vmem:[#allocation9 + $0x18] sm:$0xff]
    %v191 = vld [vmem:[#allocation9 + $0x20] sm:$0xff]
    %v192 = vld [vmem:[#allocation9 + $0x28] sm:$0xff]
    %v193 = vld [vmem:[#allocation9 + $0x30] sm:$0xff]
    %v194 = vld [vmem:[#allocation9 + $0x38] sm:$0xff]
    %v195 = vld [vmem:[#allocation9 + $0x40] sm:$0xff]
    %v196 = vld [vmem:[#allocation9 + $0x48] sm:$0xff]
    %v197 = vld [vmem:[#allocation9 + $0x50] sm:$0xff]
    %v198 = vld [vmem:[#allocation9 + $0x58] sm:$0xff]
    %v199 = vld [vmem:[#allocation9 + $0x60] sm:$0xff]
    %v200 = vld [vmem:[#allocation9 + $0x68] sm:$0xff]
    %v201 = vld [vmem:[#allocation9 + $0x70] sm:$0xff]
    %v202 = vld [vmem:[#allocation9 + $0x78] sm:$0xff]
    %s203 = scalar_lea.vmem [#allocation3], 8
    %v204 = vld [vmem:[%s203] sm:$0xff]
    %205 = vmatpush.msra.mxu0 %v202
    %206 = vmatpush.msra.mxu0 %v201
    %207 = vmatpush.msra.mxu0 %v200
    %208 = vmatpush.msra.mxu0 %v199
    %209 = vmatpush.msra.mxu0 %v198
    %210 = vmatpush.msra.mxu0 %v197
    %211 = vmatpush.msra.mxu0 %v196
    %212 = vmatpush.msra.mxu0 %v195
    %213 = vmatpush.msra.mxu0 %v194
    %214 = vmatpush.msra.mxu0 %v193
    %215 = vmatpush.msra.mxu0 %v192
    %216 = vmatpush.msra.mxu0 %v191
    %217 = vmatpush.msra.mxu0 %v190
    %218 = vmatpush.msra.mxu0 %v189
    %219 = vmatpush.msra.mxu0 %v188
    %220 = vmatpush.msra.mxu0 %v187
    %221 = vmatmul.f32.gmra.mxu0 %v185
    %v222 = vpop.f32.mrf.mxu0
    %v223 = vadd.f32 %v204, %v222
    %224 = vdwg.mxu0
    %v225 = vtanh.pop %v223
    %s226 = scalar_lea.vmem [#allocation10], 8
    %227 = vst [vmem:[%s226] sm:$0xff] %v225
    %v228 = vld [vmem:[#allocation9] sm:$0xff]
    %v229 = vld [vmem:[#allocation9 + $0x8] sm:$0xff]
    %v230 = vld [vmem:[#allocation9 + $0x10] sm:$0xff]
    %v231 = vld [vmem:[#allocation9 + $0x18] sm:$0xff]
    %v232 = vld [vmem:[#allocation9 + $0x20] sm:$0xff]
    %v233 = vld [vmem:[#allocation9 + $0x28] sm:$0xff]
    %v234 = vld [vmem:[#allocation9 + $0x30] sm:$0xff]
    %v235 = vld [vmem:[#allocation9 + $0x38] sm:$0xff]
    %v236 = vld [vmem:[#allocation9 + $0x40] sm:$0xff]
    %v237 = vld [vmem:[#allocation9 + $0x48] sm:$0xff]
    %v238 = vld [vmem:[#allocation9 + $0x50] sm:$0xff]
    %v239 = vld [vmem:[#allocation9 + $0x58] sm:$0xff]
    %v240 = vld [vmem:[#allocation9 + $0x60] sm:$0xff]
    %v241 = vld [vmem:[#allocation9 + $0x68] sm:$0xff]
    %v242 = vld [vmem:[#allocation9 + $0x70] sm:$0xff]
    %v243 = vld [vmem:[#allocation9 + $0x78] sm:$0xff]
    %s244 = scalar_lea.vmem [#allocation3], 16
    %v245 = vld [vmem:[%s244] sm:$0xff]
    %246 = vmatpush.msra.mxu0 %v243
    %247 = vmatpush.msra.mxu0 %v242
    %248 = vmatpush.msra.mxu0 %v241
    %249 = vmatpush.msra.mxu0 %v240
    %250 = vmatpush.msra.mxu0 %v239
    %251 = vmatpush.msra.mxu0 %v238
    %252 = vmatpush.msra.mxu0 %v237
    %253 = vmatpush.msra.mxu0 %v236
    %254 = vmatpush.msra.mxu0 %v235
    %255 = vmatpush.msra.mxu0 %v234
    %256 = vmatpush.msra.mxu0 %v233
    %257 = vmatpush.msra.mxu0 %v232
    %258 = vmatpush.msra.mxu0 %v231
    %259 = vmatpush.msra.mxu0 %v230
    %260 = vmatpush.msra.mxu0 %v229
    %261 = vmatpush.msra.mxu0 %v228
    %262 = vmatmul.f32.gmra.mxu0 %v225
    %v263 = vpop.f32.mrf.mxu0
    %v264 = vadd.f32 %v245, %v263
    %265 = vdwg.mxu0
    %v266 = vtanh.pop %v264
    %s267 = scalar_lea.vmem [#allocation10], 16
    %268 = vst [vmem:[%s267] sm:$0xff] %v266
    %v269 = vld [vmem:[#allocation9] sm:$0xff]
    %v270 = vld [vmem:[#allocation9 + $0x8] sm:$0xff]
    %v271 = vld [vmem:[#allocation9 + $0x10] sm:$0xff]
    %v272 = vld [vmem:[#allocation9 + $0x18] sm:$0xff]
    %v273 = vld [vmem:[#allocation9 + $0x20] sm:$0xff]
    %v274 = vld [vmem:[#allocation9 + $0x28] sm:$0xff]
    %v275 = vld [vmem:[#allocation9 + $0x30] sm:$0xff]
    %v276 = vld [vmem:[#allocation9 + $0x38] sm:$0xff]
    %v277 = vld [vmem:[#allocation9 + $0x40] sm:$0xff]
    %v278 = vld [vmem:[#allocation9 + $0x48] sm:$0xff]
    %v279 = vld [vmem:[#allocation9 + $0x50] sm:$0xff]
    %v280 = vld [vmem:[#allocation9 + $0x58] sm:$0xff]
    %v281 = vld [vmem:[#allocation9 + $0x60] sm:$0xff]
    %v282 = vld [vmem:[#allocation9 + $0x68] sm:$0xff]
    %v283 = vld [vmem:[#allocation9 + $0x70] sm:$0xff]
    %v284 = vld [vmem:[#allocation9 + $0x78] sm:$0xff]
    %s285 = scalar_lea.vmem [#allocation3], 24
    %v286 = vld [vmem:[%s285] sm:$0xff]
    %287 = vmatpush.msra.mxu0 %v284
    %288 = vmatpush.msra.mxu0 %v283
    %289 = vmatpush.msra.mxu0 %v282
    %290 = vmatpush.msra.mxu0 %v281
    %291 = vmatpush.msra.mxu0 %v280
    %292 = vmatpush.msra.mxu0 %v279
    %293 = vmatpush.msra.mxu0 %v278
    %294 = vmatpush.msra.mxu0 %v277
    %295 = vmatpush.msra.mxu0 %v276
    %296 = vmatpush.msra.mxu0 %v275
    %297 = vmatpush.msra.mxu0 %v274
    %298 = vmatpush.msra.mxu0 %v273
    %299 = vmatpush.msra.mxu0 %v272
    %300 = vmatpush.msra.mxu0 %v271
    %301 = vmatpush.msra.mxu0 %v270
    %302 = vmatpush.msra.mxu0 %v269
    %303 = vmatmul.f32.gmra.mxu0 %v266
    %v304 = vpop.f32.mrf.mxu0
    %v305 = vadd.f32 %v286, %v304
    %306 = vdwg.mxu0
    %v307 = vtanh.pop %v305
    %s308 = scalar_lea.vmem [#allocation10], 24
    %309 = vst [vmem:[%s308] sm:$0xff] %v307
    %v310 = vld [vmem:[#allocation9] sm:$0xff]
    %v311 = vld [vmem:[#allocation9 + $0x8] sm:$0xff]
    %v312 = vld [vmem:[#allocation9 + $0x10] sm:$0xff]
    %v313 = vld [vmem:[#allocation9 + $0x18] sm:$0xff]
    %v314 = vld [vmem:[#allocation9 + $0x20] sm:$0xff]
    %v315 = vld [vmem:[#allocation9 + $0x28] sm:$0xff]
    %v316 = vld [vmem:[#allocation9 + $0x30] sm:$0xff]
    %v317 = vld [vmem:[#allocation9 + $0x38] sm:$0xff]
    %v318 = vld [vmem:[#allocation9 + $0x40] sm:$0xff]
    %v319 = vld [vmem:[#allocation9 + $0x48] sm:$0xff]
    %v320 = vld [vmem:[#allocation9 + $0x50] sm:$0xff]
    %v321 = vld [vmem:[#allocation9 + $0x58] sm:$0xff]
    %v322 = vld [vmem:[#allocation9 + $0x60] sm:$0xff]
    %v323 = vld [vmem:[#allocation9 + $0x68] sm:$0xff]
    %v324 = vld [vmem:[#allocation9 + $0x70] sm:$0xff]
    %v325 = vld [vmem:[#allocation9 + $0x78] sm:$0xff]
    %s326 = scalar_lea.vmem [#allocation3], 32
    %v327 = vld [vmem:[%s326] sm:$0xff]
    %328 = vmatpush.msra.mxu0 %v325
    %329 = vmatpush.msra.mxu0 %v324
    %330 = vmatpush.msra.mxu0 %v323
    %331 = vmatpush.msra.mxu0 %v322
    %332 = vmatpush.msra.mxu0 %v321
    %333 = vmatpush.msra.mxu0 %v320
    %334 = vmatpush.msra.mxu0 %v319
    %335 = vmatpush.msra.mxu0 %v318
    %336 = vmatpush.msra.mxu0 %v317
    %337 = vmatpush.msra.mxu0 %v316
    %338 = vmatpush.msra.mxu0 %v315
    %339 = vmatpush.msra.mxu0 %v314
    %340 = vmatpush.msra.mxu0 %v313
    %341 = vmatpush.msra.mxu0 %v312
    %342 = vmatpush.msra.mxu0 %v311
    %343 = vmatpush.msra.mxu0 %v310
    %344 = vmatmul.f32.gmra.mxu0 %v307
    %v345 = vpop.f32.mrf.mxu0
    %v346 = vadd.f32 %v327, %v345
    %347 = vdwg.mxu0
    %v348 = vtanh.pop %v346
    %s349 = scalar_lea.vmem [#allocation10], 32
    %350 = vst [vmem:[%s349] sm:$0xff] %v348
    %v351 = vld [vmem:[#allocation9] sm:$0xff]
    %v352 = vld [vmem:[#allocation9 + $0x8] sm:$0xff]
    %v353 = vld [vmem:[#allocation9 + $0x10] sm:$0xff]
    %v354 = vld [vmem:[#allocation9 + $0x18] sm:$0xff]
    %v355 = vld [vmem:[#allocation9 + $0x20] sm:$0xff]
    %v356 = vld [vmem:[#allocation9 + $0x28] sm:$0xff]
    %v357 = vld [vmem:[#allocation9 + $0x30] sm:$0xff]
    %v358 = vld [vmem:[#allocation9 + $0x38] sm:$0xff]
    %v359 = vld [vmem:[#allocation9 + $0x40] sm:$0xff]
    %v360 = vld [vmem:[#allocation9 + $0x48] sm:$0xff]
    %v361 = vld [vmem:[#allocation9 + $0x50] sm:$0xff]
    %v362 = vld [vmem:[#allocation9 + $0x58] sm:$0xff]
    %v363 = vld [vmem:[#allocation9 + $0x60] sm:$0xff]
    %v364 = vld [vmem:[#allocation9 + $0x68] sm:$0xff]
    %v365 = vld [vmem:[#allocation9 + $0x70] sm:$0xff]
    %v366 = vld [vmem:[#allocation9 + $0x78] sm:$0xff]
    %s367 = scalar_lea.vmem [#allocation3], 40
    %v368 = vld [vmem:[%s367] sm:$0xff]
    %369 = vmatpush.msra.mxu0 %v366
    %370 = vmatpush.msra.mxu0 %v365
    %371 = vmatpush.msra.mxu0 %v364
    %372 = vmatpush.msra.mxu0 %v363
    %373 = vmatpush.msra.mxu0 %v362
    %374 = vmatpush.msra.mxu0 %v361
    %375 = vmatpush.msra.mxu0 %v360
    %376 = vmatpush.msra.mxu0 %v359
    %377 = vmatpush.msra.mxu0 %v358
    %378 = vmatpush.msra.mxu0 %v357
    %379 = vmatpush.msra.mxu0 %v356
    %380 = vmatpush.msra.mxu0 %v355
    %381 = vmatpush.msra.mxu0 %v354
    %382 = vmatpush.msra.mxu0 %v353
    %383 = vmatpush.msra.mxu0 %v352
    %384 = vmatpush.msra.mxu0 %v351
    %385 = vmatmul.f32.gmra.mxu0 %v348
    %v386 = vpop.f32.mrf.mxu0
    %v387 = vadd.f32 %v368, %v386
    %388 = vdwg.mxu0
    %v389 = vtanh.pop %v387
    %s390 = scalar_lea.vmem [#allocation10], 40
    %391 = vst [vmem:[%s390] sm:$0xff] %v389
    %v392 = vld [vmem:[#allocation9] sm:$0xff]
    %v393 = vld [vmem:[#allocation9 + $0x8] sm:$0xff]
    %v394 = vld [vmem:[#allocation9 + $0x10] sm:$0xff]
    %v395 = vld [vmem:[#allocation9 + $0x18] sm:$0xff]
    %v396 = vld [vmem:[#allocation9 + $0x20] sm:$0xff]
    %v397 = vld [vmem:[#allocation9 + $0x28] sm:$0xff]
    %v398 = vld [vmem:[#allocation9 + $0x30] sm:$0xff]
    %v399 = vld [vmem:[#allocation9 + $0x38] sm:$0xff]
    %v400 = vld [vmem:[#allocation9 + $0x40] sm:$0xff]
    %v401 = vld [vmem:[#allocation9 + $0x48] sm:$0xff]
    %v402 = vld [vmem:[#allocation9 + $0x50] sm:$0xff]
    %v403 = vld [vmem:[#allocation9 + $0x58] sm:$0xff]
    %v404 = vld [vmem:[#allocation9 + $0x60] sm:$0xff]
    %v405 = vld [vmem:[#allocation9 + $0x68] sm:$0xff]
    %v406 = vld [vmem:[#allocation9 + $0x70] sm:$0xff]
    %v407 = vld [vmem:[#allocation9 + $0x78] sm:$0xff]
    %s408 = scalar_lea.vmem [#allocation3], 48
    %v409 = vld [vmem:[%s408] sm:$0xff]
    %410 = vmatpush.msra.mxu0 %v407
    %411 = vmatpush.msra.mxu0 %v406
    %412 = vmatpush.msra.mxu0 %v405
    %413 = vmatpush.msra.mxu0 %v404
    %414 = vmatpush.msra.mxu0 %v403
    %415 = vmatpush.msra.mxu0 %v402
    %416 = vmatpush.msra.mxu0 %v401
    %417 = vmatpush.msra.mxu0 %v400
    %418 = vmatpush.msra.mxu0 %v399
    %419 = vmatpush.msra.mxu0 %v398
    %420 = vmatpush.msra.mxu0 %v397
    %421 = vmatpush.msra.mxu0 %v396
    %422 = vmatpush.msra.mxu0 %v395
    %423 = vmatpush.msra.mxu0 %v394
    %424 = vmatpush.msra.mxu0 %v393
    %425 = vmatpush.msra.mxu0 %v392
    %426 = vmatmul.f32.gmra.mxu0 %v389
    %v427 = vpop.f32.mrf.mxu0
    %v428 = vadd.f32 %v409, %v427
    %429 = vdwg.mxu0
    %v430 = vtanh.pop %v428
    %s431 = scalar_lea.vmem [#allocation10], 48
    %432 = vst [vmem:[%s431] sm:$0xff] %v430
    %v433 = vld [vmem:[#allocation9] sm:$0xff]
    %v434 = vld [vmem:[#allocation9 + $0x8] sm:$0xff]
    %v435 = vld [vmem:[#allocation9 + $0x10] sm:$0xff]
    %v436 = vld [vmem:[#allocation9 + $0x18] sm:$0xff]
    %v437 = vld [vmem:[#allocation9 + $0x20] sm:$0xff]
    %v438 = vld [vmem:[#allocation9 + $0x28] sm:$0xff]
    %v439 = vld [vmem:[#allocation9 + $0x30] sm:$0xff]
    %v440 = vld [vmem:[#allocation9 + $0x38] sm:$0xff]
    %v441 = vld [vmem:[#allocation9 + $0x40] sm:$0xff]
    %v442 = vld [vmem:[#allocation9 + $0x48] sm:$0xff]
    %v443 = vld [vmem:[#allocation9 + $0x50] sm:$0xff]
    %v444 = vld [vmem:[#allocation9 + $0x58] sm:$0xff]
    %v445 = vld [vmem:[#allocation9 + $0x60] sm:$0xff]
    %v446 = vld [vmem:[#allocation9 + $0x68] sm:$0xff]
    %v447 = vld [vmem:[#allocation9 + $0x70] sm:$0xff]
    %v448 = vld [vmem:[#allocation9 + $0x78] sm:$0xff]
    %s449 = scalar_lea.vmem [#allocation3], 56
    %v450 = vld [vmem:[%s449] sm:$0xff]
    %451 = vmatpush.msra.mxu0 %v448
    %452 = vmatpush.msra.mxu0 %v447
    %453 = vmatpush.msra.mxu0 %v446
    %454 = vmatpush.msra.mxu0 %v445
    %455 = vmatpush.msra.mxu0 %v444
    %456 = vmatpush.msra.mxu0 %v443
    %457 = vmatpush.msra.mxu0 %v442
    %458 = vmatpush.msra.mxu0 %v441
    %459 = vmatpush.msra.mxu0 %v440
    %460 = vmatpush.msra.mxu0 %v439
    %461 = vmatpush.msra.mxu0 %v438
    %462 = vmatpush.msra.mxu0 %v437
    %463 = vmatpush.msra.mxu0 %v436
    %464 = vmatpush.msra.mxu0 %v435
    %465 = vmatpush.msra.mxu0 %v434
    %466 = vmatpush.msra.mxu0 %v433
    %467 = vmatmul.f32.gmra.mxu0 %v430
    %v468 = vpop.f32.mrf.mxu0
    %v469 = vadd.f32 %v450, %v468
    %470 = vdwg.mxu0
    %v471 = vtanh.pop %v469
    %s472 = scalar_lea.vmem [#allocation10], 56
    %473 = vst [vmem:[%s472] sm:$0xff] %v471
    %474 = vst [vmem:[#allocation2] sm:$0xff] %v471
    // Predicated region
    $region34: #{tpu_custom_call.1} parent=1 // pred_check
      _
    $region35: #{tpu_custom_call.1} parent=1 // pred_check_branch
      %476 = sbr.rel (0) target = $region37
    $region36: #{tpu_custom_call.1} parent=1 // pred_region
      %478 = vsyncadd [#allocation6], 0
      %s479 = sshll.u32 [#allocation10], 4
      %s480 = int_to_ptr.vmem [resolvable:$true] %s479
      %s481 = sshll.u32 %s4, 4
      %s482 = int_to_ptr.hbm [resolvable:$true] %s481
      %487 = dma.vmem_to_hbm [thread:$0]  %s480, 1024, %s482, [#allocation6], 128, 128, 8
    $region37: #{tpu_custom_call.1} parent=1 // pred_fallthru
      _
    // Predicated region
    $region38: #{tpu_custom_call.1} parent=1 // pred_check
      _
    $region39: #{tpu_custom_call.1} parent=1 // pred_check_branch
      %489 = sbr.rel (0) target = $region41
    $region40: #{tpu_custom_call.1} parent=1 // pred_region
      %491 = dma.done [#allocation6], 1024
    $region41: #{tpu_custom_call.1} parent=1 // pred_fallthru
      _
    %492 = vsyncpa [#allocation5], 1
    %493 = vsyncpa [#allocation8], 1
    %494 = vsyncpa [#allocation6], 1

// kernel: tpu_custom_call.1
$region0: #{tpu_custom_call.1}
  #allocation0 [shape = 'u32[]', space=smem, size = 0x4, offset = 0x4, fixed_abs, tag = 'smem constant byte address 0x4 - core index']
  #allocation1 [shape = 'u32[72,128]{1,0:T(1,128)}', space=vmem, size = 0x9000, scoped, tag = 'internal scratch']
  #allocation2 [shape = 'f32[8,128]{1,0:T(8,128)}', space=vmem, size = 0x1000, scoped, tag = 'scratch operand']
  #allocation3 [shape = 'f32[8,8,128]{2,1,0:T(8,128)}', space=vmem, size = 0x8000, scoped, tag = 'scratch operand']
  %s0 = inlined_call_operand.hbm [shape: f32[8,8,128], index: 0, kind: input, shape index: {}]
  %s1 = inlined_call_operand.hbm [shape: f32[128,128], index: 1, kind: input, shape index: {}]
  %s2 = inlined_call_operand.hbm [shape: f32[128,128], index: 2, kind: input, shape index: {}]
  %s3 = inlined_call_operand.vmem [shape: f32[1,128], index: 3, kind: input, shape index: {}]
  %s4 = inlined_call_operand.hbm [shape: f32[8,8,128], index: 4, kind: output, shape index: {}]
  %s5 = sld [smem:[#allocation0]]
  $region42: #{tpu_custom_call.1} parent=0
    _
  %s7 = ssub.s32 1, %s5
  %s8 = scalar_select 0, %s7, %s5
  $region1: #{tpu_custom_call.1} parent=0
    #allocation4 [shape = 'u8[32768]{0}', space=vmem, size = 0x8000, scoped, tag = 'input window, operand 0, single buffered']
    #allocation5 [shape = 's32[1]{0}', space=sflag, size = 0x4, scoped, tag = 'scoped memory for tpu_custom_call.1']
    #allocation6 [shape = 's32[1]{0}', space=sflag, size = 0x4, scoped, tag = 'scoped memory for tpu_custom_call.1']
    #allocation7 [shape = 'u8[65536]{0}', space=vmem, size = 0x10000, scoped, tag = 'input window, operand 1, single buffered']
    #allocation8 [shape = 's32[1]{0}', space=sflag, size = 0x4, scoped, tag = 'scoped memory for tpu_custom_call.1']
    #allocation9 [shape = 'u8[65536]{0}', space=vmem, size = 0x10000, scoped, tag = 'input window, operand 2, single buffered']
    #allocation10 [shape = 'u8[32768]{0}', space=vmem, size = 0x8000, scoped, tag = 'output window, operand 0, single buffered']
    %9 = vsyncpa [#allocation5], 0
    %10 = vsyncpa [#allocation8], 0
    %11 = vsyncpa [#allocation6], 0
    // Predicated region
    $region2: #{tpu_custom_call.1} parent=1 // pred_check
      _
    $region3: #{tpu_custom_call.1} parent=1 // pred_check_branch
      %13 = sbr.rel (0) target = $region5
    $region4: #{tpu_custom_call.1} parent=1 // pred_region
      %15 = vsyncadd [#allocation5], 0
      %s16 = sshll.u32 %s0, 4
      %s17 = int_to_ptr.hbm [resolvable:$true] %s16
      %s18 = sshll.u32 [#allocation4], 4
      %s19 = int_to_ptr.vmem [resolvable:$true] %s18
      %24 = dma.hbm_to_vmem [thread:$0]  %s17, 1024, %s19, [#allocation5], 128, 128, 8
    $region5: #{tpu_custom_call.1} parent=1 // pred_fallthru
      _
    // Predicated region
    $region6: #{tpu_custom_call.1} parent=1 // pred_check
      _
    $region7: #{tpu_custom_call.1} parent=1 // pred_check_branch
      %26 = sbr.rel (0) target = $region9
    $region8: #{tpu_custom_call.1} parent=1 // pred_region
      %28 = vsyncadd [#allocation8], 0
      %s29 = sshll.u32 %s1, 4
      %s30 = int_to_ptr.hbm [resolvable:$true] %s29
      %s31 = sshll.u32 [#allocation7], 4
      %s32 = int_to_ptr.vmem [resolvable:$true] %s31
      %37 = dma.hbm_to_vmem [thread:$0]  %s30, 2048, %s32, [#allocation8], 128, 128, 8
    $region9: #{tpu_custom_call.1} parent=1 // pred_fallthru
      _
    // Predicated region
    $region10: #{tpu_custom_call.1} parent=1 // pred_check
      _
    $region11: #{tpu_custom_call.1} parent=1 // pred_check_branch
      %39 = sbr.rel (0) target = $region13
    $region12: #{tpu_custom_call.1} parent=1 // pred_region
      %41 = vsyncadd [#allocation8], 0
      %s42 = sshll.u32 %s2, 4
      %s43 = int_to_ptr.hbm [resolvable:$true] %s42
      %s44 = sshll.u32 [#allocation9], 4
      %s45 = int_to_ptr.vmem [resolvable:$true] %s44
      %50 = dma.hbm_to_vmem [thread:$0]  %s43, 2048, %s45, [#allocation8], 128, 128, 8
    $region13: #{tpu_custom_call.1} parent=1 // pred_fallthru
      _
    // Predicated region
    $region14: #{tpu_custom_call.1} parent=1 // pred_check
      _
    $region15: #{tpu_custom_call.1} parent=1 // pred_check_branch
      %52 = sbr.rel (0) target = $region17
    $region16: #{tpu_custom_call.1} parent=1 // pred_region
      _
    $region17: #{tpu_custom_call.1} parent=1 // pred_fallthru
      _
    // Predicated region
    $region18: #{tpu_custom_call.1} parent=1 // pred_check
      _
    $region19: #{tpu_custom_call.1} parent=1 // pred_check_branch
      %54 = sbr.rel (0) target = $region21
    $region20: #{tpu_custom_call.1} parent=1 // pred_region
      %56 = dma.done [#allocation5], 1024
    $region21: #{tpu_custom_call.1} parent=1 // pred_fallthru
      _
    // Predicated region
    $region22: #{tpu_custom_call.1} parent=1 // pred_check
      _
    $region23: #{tpu_custom_call.1} parent=1 // pred_check_branch
      %58 = sbr.rel (0) target = $region25
    $region24: #{tpu_custom_call.1} parent=1 // pred_region
      %60 = dma.done [#allocation8], 2048
    $region25: #{tpu_custom_call.1} parent=1 // pred_fallthru
      _
    // Predicated region
    $region26: #{tpu_custom_call.1} parent=1 // pred_check
      _
    $region27: #{tpu_custom_call.1} parent=1 // pred_check_branch
      %62 = sbr.rel (0) target = $region29
    $region28: #{tpu_custom_call.1} parent=1 // pred_region
      %64 = dma.done [#allocation8], 2048
    $region29: #{tpu_custom_call.1} parent=1 // pred_fallthru
      _
    %p65 = scmp.eq.s32.totalorder 0, 0
    // Predicated region
    $region30: #{tpu_custom_call.1} parent=1 // pred_check
      %p66 = pneg %p65
    $region31: #{tpu_custom_call.1} parent=1 // pred_check_branch
      %68 = sbr.rel (%p66) target = $region33
    $region32: #{tpu_custom_call.1} parent=1 // pred_region
      %69 = vst [vmem:[#allocation2] sm:$0xff] 0.0
    $region33: #{tpu_custom_call.1} parent=1 // pred_fallthru
      _
    %v70 = vld [vmem:[#allocation4] sm:$0xff]
    %v71 = vld [vmem:[#allocation4 + $0x8] sm:$0xff]
    %v72 = vld [vmem:[#allocation4 + $0x10] sm:$0xff]
    %v73 = vld [vmem:[#allocation4 + $0x18] sm:$0xff]
    %v74 = vld [vmem:[#allocation4 + $0x20] sm:$0xff]
    %v75 = vld [vmem:[#allocation4 + $0x28] sm:$0xff]
    %v76 = vld [vmem:[#allocation4 + $0x30] sm:$0xff]
    %v77 = vld [vmem:[#allocation4 + $0x38] sm:$0xff]
    %v78 = vld [vmem:[#allocation7] sm:$0xff]
    %v79 = vld [vmem:[#allocation7 + $0x8] sm:$0xff]
    %v80 = vld [vmem:[#allocation7 + $0x10] sm:$0xff]
    %v81 = vld [vmem:[#allocation7 + $0x18] sm:$0xff]
    %v82 = vld [vmem:[#allocation7 + $0x20] sm:$0xff]
    %v83 = vld [vmem:[#allocation7 + $0x28] sm:$0xff]
    %v84 = vld [vmem:[#allocation7 + $0x30] sm:$0xff]
    %v85 = vld [vmem:[#allocation7 + $0x38] sm:$0xff]
    %v86 = vld [vmem:[#allocation7 + $0x40] sm:$0xff]
    %v87 = vld [vmem:[#allocation7 + $0x48] sm:$0xff]
    %v88 = vld [vmem:[#allocation7 + $0x50] sm:$0xff]
    %v89 = vld [vmem:[#allocation7 + $0x58] sm:$0xff]
    %v90 = vld [vmem:[#allocation7 + $0x60] sm:$0xff]
    %v91 = vld [vmem:[#allocation7 + $0x68] sm:$0xff]
    %v92 = vld [vmem:[#allocation7 + $0x70] sm:$0xff]
    %v93 = vld [vmem:[#allocation7 + $0x78] sm:$0xff]
    %v94 = vld [vmem:[%s3] sm:$0x1]
    %v96 = vperm.slane %v94, 0
    %98 = vmatpush.msra.mxu0 %v93
    %99 = vmatpush.msra.mxu0 %v92
    %100 = vmatpush.msra.mxu0 %v91
    %101 = vmatpush.msra.mxu0 %v90
    %102 = vmatpush.msra.mxu0 %v89
    %103 = vmatpush.msra.mxu0 %v88
    %104 = vmatpush.msra.mxu0 %v87
    %105 = vmatpush.msra.mxu0 %v86
    %106 = vmatpush.msra.mxu0 %v85
    %107 = vmatpush.msra.mxu0 %v84
    %108 = vmatpush.msra.mxu0 %v83
    %109 = vmatpush.msra.mxu0 %v82
    %110 = vmatpush.msra.mxu0 %v81
    %111 = vmatpush.msra.mxu0 %v80
    %112 = vmatpush.msra.mxu0 %v79
    %113 = vmatpush.msra.mxu0 %v78
    %114 = vmatmul.f32.gmra.mxu0 %v70
    %v115 = vpop.f32.mrf.mxu0
    %v116 = vadd.f32 %v96, %v115
    %117 = vmatmul.f32.gmra.mxu0 %v71
    %v118 = vpop.f32.mrf.mxu0
    %v119 = vadd.f32 %v96, %v118
    %120 = vmatmul.f32.gmra.mxu0 %v72
    %v121 = vpop.f32.mrf.mxu0
    %v122 = vadd.f32 %v96, %v121
    %123 = vmatmul.f32.gmra.mxu0 %v73
    %v124 = vpop.f32.mrf.mxu0
    %v125 = vadd.f32 %v96, %v124
    %126 = vmatmul.f32.gmra.mxu0 %v74
    %v127 = vpop.f32.mrf.mxu0
    %v128 = vadd.f32 %v96, %v127
    %129 = vmatmul.f32.gmra.mxu0 %v75
    %v130 = vpop.f32.mrf.mxu0
    %v131 = vadd.f32 %v96, %v130
    %132 = vmatmul.f32.gmra.mxu0 %v76
    %v133 = vpop.f32.mrf.mxu0
    %v134 = vadd.f32 %v96, %v133
    %135 = vmatmul.f32.gmra.mxu0 %v77
    %v136 = vpop.f32.mrf.mxu0
    %v137 = vadd.f32 %v96, %v136
    %138 = vdwg.mxu0
    %139 = vst [vmem:[#allocation3] sm:$0xff] %v116
    %140 = vst [vmem:[#allocation3 + $0x8] sm:$0xff] %v119
    %141 = vst [vmem:[#allocation3 + $0x10] sm:$0xff] %v122
    %142 = vst [vmem:[#allocation3 + $0x18] sm:$0xff] %v125
    %143 = vst [vmem:[#allocation3 + $0x20] sm:$0xff] %v128
    %144 = vst [vmem:[#allocation3 + $0x28] sm:$0xff] %v131
    %145 = vst [vmem:[#allocation3 + $0x30] sm:$0xff] %v134
    %146 = vst [vmem:[#allocation3 + $0x38] sm:$0xff] %v137
    %v147 = vld [vmem:[#allocation2] sm:$0xff]
    %v148 = vld [vmem:[#allocation9] sm:$0xff]
    %v149 = vld [vmem:[#allocation9 + $0x8] sm:$0xff]
    %v150 = vld [vmem:[#allocation9 + $0x10] sm:$0xff]
    %v151 = vld [vmem:[#allocation9 + $0x18] sm:$0xff]
    %v152 = vld [vmem:[#allocation9 + $0x20] sm:$0xff]
    %v153 = vld [vmem:[#allocation9 + $0x28] sm:$0xff]
    %v154 = vld [vmem:[#allocation9 + $0x30] sm:$0xff]
    %v155 = vld [vmem:[#allocation9 + $0x38] sm:$0xff]
    %v156 = vld [vmem:[#allocation9 + $0x40] sm:$0xff]
    %v157 = vld [vmem:[#allocation9 + $0x48] sm:$0xff]
    %v158 = vld [vmem:[#allocation9 + $0x50] sm:$0xff]
    %v159 = vld [vmem:[#allocation9 + $0x58] sm:$0xff]
    %v160 = vld [vmem:[#allocation9 + $0x60] sm:$0xff]
    %v161 = vld [vmem:[#allocation9 + $0x68] sm:$0xff]
    %v162 = vld [vmem:[#allocation9 + $0x70] sm:$0xff]
    %v163 = vld [vmem:[#allocation9 + $0x78] sm:$0xff]
    %v164 = vld [vmem:[#allocation3] sm:$0xff]
    %165 = vmatpush.msra.mxu0 %v163
    %166 = vmatpush.msra.mxu0 %v162
    %167 = vmatpush.msra.mxu0 %v161
    %168 = vmatpush.msra.mxu0 %v160
    %169 = vmatpush.msra.mxu0 %v159
    %170 = vmatpush.msra.mxu0 %v158
    %171 = vmatpush.msra.mxu0 %v157
    %172 = vmatpush.msra.mxu0 %v156
    %173 = vmatpush.msra.mxu0 %v155
    %174 = vmatpush.msra.mxu0 %v154
    %175 = vmatpush.msra.mxu0 %v153
    %176 = vmatpush.msra.mxu0 %v152
    %177 = vmatpush.msra.mxu0 %v151
    %178 = vmatpush.msra.mxu0 %v150
    %179 = vmatpush.msra.mxu0 %v149
    %180 = vmatpush.msra.mxu0 %v148
    %181 = vmatmul.f32.gmra.mxu0 %v147
    %v182 = vpop.f32.mrf.mxu0
    %v183 = vadd.f32 %v164, %v182
    %184 = vdwg.mxu0
    %v185 = vtanh.pop %v183
    %186 = vst [vmem:[#allocation10] sm:$0xff] %v185
    %v187 = vld [vmem:[#allocation9] sm:$0xff]
    %v188 = vld [vmem:[#allocation9 + $0x8] sm:$0xff]
    %v189 = vld [vmem:[#allocation9 + $0x10] sm:$0xff]
    %v190 = vld [vmem:[#allocation9 + $0x18] sm:$0xff]
    %v191 = vld [vmem:[#allocation9 + $0x20] sm:$0xff]
    %v192 = vld [vmem:[#allocation9 + $0x28] sm:$0xff]
    %v193 = vld [vmem:[#allocation9 + $0x30] sm:$0xff]
    %v194 = vld [vmem:[#allocation9 + $0x38] sm:$0xff]
    %v195 = vld [vmem:[#allocation9 + $0x40] sm:$0xff]
    %v196 = vld [vmem:[#allocation9 + $0x48] sm:$0xff]
    %v197 = vld [vmem:[#allocation9 + $0x50] sm:$0xff]
    %v198 = vld [vmem:[#allocation9 + $0x58] sm:$0xff]
    %v199 = vld [vmem:[#allocation9 + $0x60] sm:$0xff]
    %v200 = vld [vmem:[#allocation9 + $0x68] sm:$0xff]
    %v201 = vld [vmem:[#allocation9 + $0x70] sm:$0xff]
    %v202 = vld [vmem:[#allocation9 + $0x78] sm:$0xff]
    %s203 = scalar_lea.vmem [#allocation3], 8
    %v204 = vld [vmem:[%s203] sm:$0xff]
    %205 = vmatpush.msra.mxu0 %v202
    %206 = vmatpush.msra.mxu0 %v201
    %207 = vmatpush.msra.mxu0 %v200
    %208 = vmatpush.msra.mxu0 %v199
    %209 = vmatpush.msra.mxu0 %v198
    %210 = vmatpush.msra.mxu0 %v197
    %211 = vmatpush.msra.mxu0 %v196
    %212 = vmatpush.msra.mxu0 %v195
    %213 = vmatpush.msra.mxu0 %v194
    %214 = vmatpush.msra.mxu0 %v193
    %215 = vmatpush.msra.mxu0 %v192
    %216 = vmatpush.msra.mxu0 %v191
    %217 = vmatpush.msra.mxu0 %v190
    %218 = vmatpush.msra.mxu0 %v189
    %219 = vmatpush.msra.mxu0 %v188
    %220 = vmatpush.msra.mxu0 %v187
    %221 = vmatmul.f32.gmra.mxu0 %v185
    %v222 = vpop.f32.mrf.mxu0
    %v223 = vadd.f32 %v204, %v222
    %224 = vdwg.mxu0
    %v225 = vtanh.pop %v223
    %s226 = scalar_lea.vmem [#allocation10], 8
    %227 = vst [vmem:[%s226] sm:$0xff] %v225
    %v228 = vld [vmem:[#allocation9] sm:$0xff]
    %v229 = vld [vmem:[#allocation9 + $0x8] sm:$0xff]
    %v230 = vld [vmem:[#allocation9 + $0x10] sm:$0xff]
    %v231 = vld [vmem:[#allocation9 + $0x18] sm:$0xff]
    %v232 = vld [vmem:[#allocation9 + $0x20] sm:$0xff]
    %v233 = vld [vmem:[#allocation9 + $0x28] sm:$0xff]
    %v234 = vld [vmem:[#allocation9 + $0x30] sm:$0xff]
    %v235 = vld [vmem:[#allocation9 + $0x38] sm:$0xff]
    %v236 = vld [vmem:[#allocation9 + $0x40] sm:$0xff]
    %v237 = vld [vmem:[#allocation9 + $0x48] sm:$0xff]
    %v238 = vld [vmem:[#allocation9 + $0x50] sm:$0xff]
    %v239 = vld [vmem:[#allocation9 + $0x58] sm:$0xff]
    %v240 = vld [vmem:[#allocation9 + $0x60] sm:$0xff]
    %v241 = vld [vmem:[#allocation9 + $0x68] sm:$0xff]
    %v242 = vld [vmem:[#allocation9 + $0x70] sm:$0xff]
    %v243 = vld [vmem:[#allocation9 + $0x78] sm:$0xff]
    %s244 = scalar_lea.vmem [#allocation3], 16
    %v245 = vld [vmem:[%s244] sm:$0xff]
    %246 = vmatpush.msra.mxu0 %v243
    %247 = vmatpush.msra.mxu0 %v242
    %248 = vmatpush.msra.mxu0 %v241
    %249 = vmatpush.msra.mxu0 %v240
    %250 = vmatpush.msra.mxu0 %v239
    %251 = vmatpush.msra.mxu0 %v238
    %252 = vmatpush.msra.mxu0 %v237
    %253 = vmatpush.msra.mxu0 %v236
    %254 = vmatpush.msra.mxu0 %v235
    %255 = vmatpush.msra.mxu0 %v234
    %256 = vmatpush.msra.mxu0 %v233
    %257 = vmatpush.msra.mxu0 %v232
    %258 = vmatpush.msra.mxu0 %v231
    %259 = vmatpush.msra.mxu0 %v230
    %260 = vmatpush.msra.mxu0 %v229
    %261 = vmatpush.msra.mxu0 %v228
    %262 = vmatmul.f32.gmra.mxu0 %v225
    %v263 = vpop.f32.mrf.mxu0
    %v264 = vadd.f32 %v245, %v263
    %265 = vdwg.mxu0
    %v266 = vtanh.pop %v264
    %s267 = scalar_lea.vmem [#allocation10], 16
    %268 = vst [vmem:[%s267] sm:$0xff] %v266
    %v269 = vld [vmem:[#allocation9] sm:$0xff]
    %v270 = vld [vmem:[#allocation9 + $0x8] sm:$0xff]
    %v271 = vld [vmem:[#allocation9 + $0x10] sm:$0xff]
    %v272 = vld [vmem:[#allocation9 + $0x18] sm:$0xff]
    %v273 = vld [vmem:[#allocation9 + $0x20] sm:$0xff]
    %v274 = vld [vmem:[#allocation9 + $0x28] sm:$0xff]
    %v275 = vld [vmem:[#allocation9 + $0x30] sm:$0xff]
    %v276 = vld [vmem:[#allocation9 + $0x38] sm:$0xff]
    %v277 = vld [vmem:[#allocation9 + $0x40] sm:$0xff]
    %v278 = vld [vmem:[#allocation9 + $0x48] sm:$0xff]
    %v279 = vld [vmem:[#allocation9 + $0x50] sm:$0xff]
    %v280 = vld [vmem:[#allocation9 + $0x58] sm:$0xff]
    %v281 = vld [vmem:[#allocation9 + $0x60] sm:$0xff]
    %v282 = vld [vmem:[#allocation9 + $0x68] sm:$0xff]
    %v283 = vld [vmem:[#allocation9 + $0x70] sm:$0xff]
    %v284 = vld [vmem:[#allocation9 + $0x78] sm:$0xff]
    %s285 = scalar_lea.vmem [#allocation3], 24
    %v286 = vld [vmem:[%s285] sm:$0xff]
    %287 = vmatpush.msra.mxu0 %v284
    %288 = vmatpush.msra.mxu0 %v283
    %289 = vmatpush.msra.mxu0 %v282
    %290 = vmatpush.msra.mxu0 %v281
    %291 = vmatpush.msra.mxu0 %v280
    %292 = vmatpush.msra.mxu0 %v279
    %293 = vmatpush.msra.mxu0 %v278
    %294 = vmatpush.msra.mxu0 %v277
    %295 = vmatpush.msra.mxu0 %v276
    %296 = vmatpush.msra.mxu0 %v275
    %297 = vmatpush.msra.mxu0 %v274
    %298 = vmatpush.msra.mxu0 %v273
    %299 = vmatpush.msra.mxu0 %v272
    %300 = vmatpush.msra.mxu0 %v271
    %301 = vmatpush.msra.mxu0 %v270
    %302 = vmatpush.msra.mxu0 %v269
    %303 = vmatmul.f32.gmra.mxu0 %v266
    %v304 = vpop.f32.mrf.mxu0
    %v305 = vadd.f32 %v286, %v304
    %306 = vdwg.mxu0
    %v307 = vtanh.pop %v305
    %s308 = scalar_lea.vmem [#allocation10], 24
    %309 = vst [vmem:[%s308] sm:$0xff] %v307
    %v310 = vld [vmem:[#allocation9] sm:$0xff]
    %v311 = vld [vmem:[#allocation9 + $0x8] sm:$0xff]
    %v312 = vld [vmem:[#allocation9 + $0x10] sm:$0xff]
    %v313 = vld [vmem:[#allocation9 + $0x18] sm:$0xff]
    %v314 = vld [vmem:[#allocation9 + $0x20] sm:$0xff]
    %v315 = vld [vmem:[#allocation9 + $0x28] sm:$0xff]
    %v316 = vld [vmem:[#allocation9 + $0x30] sm:$0xff]
    %v317 = vld [vmem:[#allocation9 + $0x38] sm:$0xff]
    %v318 = vld [vmem:[#allocation9 + $0x40] sm:$0xff]
    %v319 = vld [vmem:[#allocation9 + $0x48] sm:$0xff]
    %v320 = vld [vmem:[#allocation9 + $0x50] sm:$0xff]
    %v321 = vld [vmem:[#allocation9 + $0x58] sm:$0xff]
    %v322 = vld [vmem:[#allocation9 + $0x60] sm:$0xff]
    %v323 = vld [vmem:[#allocation9 + $0x68] sm:$0xff]
    %v324 = vld [vmem:[#allocation9 + $0x70] sm:$0xff]
    %v325 = vld [vmem:[#allocation9 + $0x78] sm:$0xff]
    %s326 = scalar_lea.vmem [#allocation3], 32
    %v327 = vld [vmem:[%s326] sm:$0xff]
    %328 = vmatpush.msra.mxu0 %v325
    %329 = vmatpush.msra.mxu0 %v324
    %330 = vmatpush.msra.mxu0 %v323
    %331 = vmatpush.msra.mxu0 %v322
    %332 = vmatpush.msra.mxu0 %v321
    %333 = vmatpush.msra.mxu0 %v320
    %334 = vmatpush.msra.mxu0 %v319
    %335 = vmatpush.msra.mxu0 %v318
    %336 = vmatpush.msra.mxu0 %v317
    %337 = vmatpush.msra.mxu0 %v316
    %338 = vmatpush.msra.mxu0 %v315
    %339 = vmatpush.msra.mxu0 %v314
    %340 = vmatpush.msra.mxu0 %v313
    %341 = vmatpush.msra.mxu0 %v312
    %342 = vmatpush.msra.mxu0 %v311
    %343 = vmatpush.msra.mxu0 %v310
    %344 = vmatmul.f32.gmra.mxu0 %v307
    %v345 = vpop.f32.mrf.mxu0
    %v346 = vadd.f32 %v327, %v345
    %347 = vdwg.mxu0
    %v348 = vtanh.pop %v346
    %s349 = scalar_lea.vmem [#allocation10], 32
    %350 = vst [vmem:[%s349] sm:$0xff] %v348
    %v351 = vld [vmem:[#allocation9] sm:$0xff]
    %v352 = vld [vmem:[#allocation9 + $0x8] sm:$0xff]
    %v353 = vld [vmem:[#allocation9 + $0x10] sm:$0xff]
    %v354 = vld [vmem:[#allocation9 + $0x18] sm:$0xff]
    %v355 = vld [vmem:[#allocation9 + $0x20] sm:$0xff]
    %v356 = vld [vmem:[#allocation9 + $0x28] sm:$0xff]
    %v357 = vld [vmem:[#allocation9 + $0x30] sm:$0xff]
    %v358 = vld [vmem:[#allocation9 + $0x38] sm:$0xff]
    %v359 = vld [vmem:[#allocation9 + $0x40] sm:$0xff]
    %v360 = vld [vmem:[#allocation9 + $0x48] sm:$0xff]
    %v361 = vld [vmem:[#allocation9 + $0x50] sm:$0xff]
    %v362 = vld [vmem:[#allocation9 + $0x58] sm:$0xff]
    %v363 = vld [vmem:[#allocation9 + $0x60] sm:$0xff]
    %v364 = vld [vmem:[#allocation9 + $0x68] sm:$0xff]
    %v365 = vld [vmem:[#allocation9 + $0x70] sm:$0xff]
    %v366 = vld [vmem:[#allocation9 + $0x78] sm:$0xff]
    %s367 = scalar_lea.vmem [#allocation3], 40
    %v368 = vld [vmem:[%s367] sm:$0xff]
    %369 = vmatpush.msra.mxu0 %v366
    %370 = vmatpush.msra.mxu0 %v365
    %371 = vmatpush.msra.mxu0 %v364
    %372 = vmatpush.msra.mxu0 %v363
    %373 = vmatpush.msra.mxu0 %v362
    %374 = vmatpush.msra.mxu0 %v361
    %375 = vmatpush.msra.mxu0 %v360
    %376 = vmatpush.msra.mxu0 %v359
    %377 = vmatpush.msra.mxu0 %v358
    %378 = vmatpush.msra.mxu0 %v357
    %379 = vmatpush.msra.mxu0 %v356
    %380 = vmatpush.msra.mxu0 %v355
    %381 = vmatpush.msra.mxu0 %v354
    %382 = vmatpush.msra.mxu0 %v353
    %383 = vmatpush.msra.mxu0 %v352
    %384 = vmatpush.msra.mxu0 %v351
    %385 = vmatmul.f32.gmra.mxu0 %v348
    %v386 = vpop.f32.mrf.mxu0
    %v387 = vadd.f32 %v368, %v386
    %388 = vdwg.mxu0
    %v389 = vtanh.pop %v387
    %s390 = scalar_lea.vmem [#allocation10], 40
    %391 = vst [vmem:[%s390] sm:$0xff] %v389
    %v392 = vld [vmem:[#allocation9] sm:$0xff]
    %v393 = vld [vmem:[#allocation9 + $0x8] sm:$0xff]
    %v394 = vld [vmem:[#allocation9 + $0x10] sm:$0xff]
    %v395 = vld [vmem:[#allocation9 + $0x18] sm:$0xff]
    %v396 = vld [vmem:[#allocation9 + $0x20] sm:$0xff]
    %v397 = vld [vmem:[#allocation9 + $0x28] sm:$0xff]
    %v398 = vld [vmem:[#allocation9 + $0x30] sm:$0xff]
    %v399 = vld [vmem:[#allocation9 + $0x38] sm:$0xff]
    %v400 = vld [vmem:[#allocation9 + $0x40] sm:$0xff]
    %v401 = vld [vmem:[#allocation9 + $0x48] sm:$0xff]
    %v402 = vld [vmem:[#allocation9 + $0x50] sm:$0xff]
    %v403 = vld [vmem:[#allocation9 + $0x58] sm:$0xff]
    %v404 = vld [vmem:[#allocation9 + $0x60] sm:$0xff]
    %v405 = vld [vmem:[#allocation9 + $0x68] sm:$0xff]
    %v406 = vld [vmem:[#allocation9 + $0x70] sm:$0xff]
    %v407 = vld [vmem:[#allocation9 + $0x78] sm:$0xff]
    %s408 = scalar_lea.vmem [#allocation3], 48
    %v409 = vld [vmem:[%s408] sm:$0xff]
    %410 = vmatpush.msra.mxu0 %v407
    %411 = vmatpush.msra.mxu0 %v406
    %412 = vmatpush.msra.mxu0 %v405
    %413 = vmatpush.msra.mxu0 %v404
    %414 = vmatpush.msra.mxu0 %v403
    %415 = vmatpush.msra.mxu0 %v402
    %416 = vmatpush.msra.mxu0 %v401
    %417 = vmatpush.msra.mxu0 %v400
    %418 = vmatpush.msra.mxu0 %v399
    %419 = vmatpush.msra.mxu0 %v398
    %420 = vmatpush.msra.mxu0 %v397
    %421 = vmatpush.msra.mxu0 %v396
    %422 = vmatpush.msra.mxu0 %v395
    %423 = vmatpush.msra.mxu0 %v394
    %424 = vmatpush.msra.mxu0 %v393
    %425 = vmatpush.msra.mxu0 %v392
    %426 = vmatmul.f32.gmra.mxu0 %v389
    %v427 = vpop.f32.mrf.mxu0
    %v428 = vadd.f32 %v409, %v427
    %429 = vdwg.mxu0
    %v430 = vtanh.pop %v428
    %s431 = scalar_lea.vmem [#allocation10], 48
    %432 = vst [vmem:[%s431] sm:$0xff] %v430
    %v433 = vld [vmem:[#allocation9] sm:$0xff]
    %v434 = vld [vmem:[#allocation9 + $0x8] sm:$0xff]
    %v435 = vld [vmem:[#allocation9 + $0x10] sm:$0xff]
    %v436 = vld [vmem:[#allocation9 + $0x18] sm:$0xff]
    %v437 = vld [vmem:[#allocation9 + $0x20] sm:$0xff]
    %v438 = vld [vmem:[#allocation9 + $0x28] sm:$0xff]
    %v439 = vld [vmem:[#allocation9 + $0x30] sm:$0xff]
    %v440 = vld [vmem:[#allocation9 + $0x38] sm:$0xff]
    %v441 = vld [vmem:[#allocation9 + $0x40] sm:$0xff]
    %v442 = vld [vmem:[#allocation9 + $0x48] sm:$0xff]
    %v443 = vld [vmem:[#allocation9 + $0x50] sm:$0xff]
    %v444 = vld [vmem:[#allocation9 + $0x58] sm:$0xff]
    %v445 = vld [vmem:[#allocation9 + $0x60] sm:$0xff]
    %v446 = vld [vmem:[#allocation9 + $0x68] sm:$0xff]
    %v447 = vld [vmem:[#allocation9 + $0x70] sm:$0xff]
    %v448 = vld [vmem:[#allocation9 + $0x78] sm:$0xff]
    %s449 = scalar_lea.vmem [#allocation3], 56
    %v450 = vld [vmem:[%s449] sm:$0xff]
    %451 = vmatpush.msra.mxu0 %v448
    %452 = vmatpush.msra.mxu0 %v447
    %453 = vmatpush.msra.mxu0 %v446
    %454 = vmatpush.msra.mxu0 %v445
    %455 = vmatpush.msra.mxu0 %v444
    %456 = vmatpush.msra.mxu0 %v443
    %457 = vmatpush.msra.mxu0 %v442
    %458 = vmatpush.msra.mxu0 %v441
    %459 = vmatpush.msra.mxu0 %v440
    %460 = vmatpush.msra.mxu0 %v439
    %461 = vmatpush.msra.mxu0 %v438
    %462 = vmatpush.msra.mxu0 %v437
    %463 = vmatpush.msra.mxu0 %v436
    %464 = vmatpush.msra.mxu0 %v435
    %465 = vmatpush.msra.mxu0 %v434
    %466 = vmatpush.msra.mxu0 %v433
    %467 = vmatmul.f32.gmra.mxu0 %v430
    %v468 = vpop.f32.mrf.mxu0
    %v469 = vadd.f32 %v450, %v468
    %470 = vdwg.mxu0
    %v471 = vtanh.pop %v469
    %s472 = scalar_lea.vmem [#allocation10], 56
    %473 = vst [vmem:[%s472] sm:$0xff] %v471
    %474 = vst [vmem:[#allocation2] sm:$0xff] %v471
    // Predicated region
    $region34: #{tpu_custom_call.1} parent=1 // pred_check
      _
    $region35: #{tpu_custom_call.1} parent=1 // pred_check_branch
      %476 = sbr.rel (0) target = $region37
    $region36: #{tpu_custom_call.1} parent=1 // pred_region
      %478 = vsyncadd [#allocation6], 0
      %s479 = sshll.u32 [#allocation10], 4
      %s480 = int_to_ptr.vmem [resolvable:$true] %s479
      %s481 = sshll.u32 %s4, 4
      %s482 = int_to_ptr.hbm [resolvable:$true] %s481
      %487 = dma.vmem_to_hbm [thread:$0]  %s480, 1024, %s482, [#allocation6], 128, 128, 8
    $region37: #{tpu_custom_call.1} parent=1 // pred_fallthru
      _
    // Predicated region
    $region38: #{tpu_custom_call.1} parent=1 // pred_check
      _
    $region39: #{tpu_custom_call.1} parent=1 // pred_check_branch
      %489 = sbr.rel (0) target = $region41
    $region40: #{tpu_custom_call.1} parent=1 // pred_region
      %491 = dma.done [#allocation6], 1024
    $region41: #{tpu_custom_call.1} parent=1 // pred_fallthru
      _
    %492 = vsyncpa [#allocation5], 1
    %493 = vsyncpa [#allocation8], 1
    %494 = vsyncpa [#allocation6], 1

</llo_original>
